<compile_context>
chip_gen: v5e
topology: v5e:2x2
jax: 0.10.0
libtpu: 0.0.40
codegen_flags: <defaults>
</compile_context>

<pallas_src>
import jax
import jax.numpy as jnp
from jax import lax
from jax.experimental import pallas as pl
from jax.experimental.pallas import tpu as pltpu

GROUPS = 32          # nn.GroupNorm(32, out_channels)
EPS = 1e-5           # torch GroupNorm default eps


# ----------------------------------------------------------------------------
# Pallas kernel: conv (in-kernel shifted taps) + optional bias + GroupNorm(32)
#                + ReLU (+ optional fused recurrent state add)
# ----------------------------------------------------------------------------
def _conv_gn_relu(x_pad, w_taps, bias, gamma, beta, m_mat, mt_mat, state_flat,
                  k, Ho, Wo, out_dtype):
    """x_pad: (N, Hp, Wp, Cin) bf16 spatially-padded NHWC input.
    w_taps: (k*k, Cin, C) bf16, tap order (kh, kw).
    bias (or None) / gamma / beta: (1, C) f32.
    m_mat: (C, G) f32 one-hot channel->group, mt_mat: (G, C) f32 group->channel.
    state_flat: optional (N, Ho*Wo, C) bf16 added AFTER the ReLU (recurrent skip).
    Returns (N, Ho*Wo, C) in out_dtype."""
    N, Hp, Wp, Cin = x_pad.shape
    C = w_taps.shape[-1]
    G = GROUPS
    P = Ho * Wo
    inv_count = 1.0 / float(P * (C // G))
    has_bias = bias is not None
    add_state = state_flat is not None

    def kernel(*refs):
        it = iter(refs)
        x_ref = next(it)
        w_ref = next(it)
        b_ref = next(it) if has_bias else None
        ga_ref = next(it)
        be_ref = next(it)
        m_ref = next(it)
        mt_ref = next(it)
        s_ref = next(it) if add_state else None
        out_ref = next(it)

        x = x_ref[0]                                           # (Hp, Wp, Cin) bf16

        # conv as K*K shifted-tap matmuls, f32 accumulation on the MXU
        acc = jnp.zeros((P, C), jnp.float32)
        for kh in range(k):
            for kw in range(k):
                xs = x[kh:kh + Ho, kw:kw + Wo, :].reshape(P, Cin)      # bf16
                acc = acc + jnp.dot(xs, w_ref[kh * k + kw],
                                    preferred_element_type=jnp.float32)
        if has_bias:
            y = acc + b_ref[...]                               # (P, C) f32
        else:
            y = acc

        # GroupNorm(32): per-channel sums -> group stats via one tiny matmul
        # with host-baked one-hot group matrices.
        ch_sum = jnp.sum(y, axis=0, keepdims=True)             # (1, C)
        ch_sumsq = jnp.sum(y * y, axis=0, keepdims=True)       # (1, C)
        stats = jnp.concatenate([ch_sum, ch_sumsq], axis=0)    # (2, C)
        g = jnp.dot(stats, m_ref[...],
                    preferred_element_type=jnp.float32) * inv_count   # (2, G)
        g_mean = g[0:1]                                        # (1, G)
        g_var = jnp.maximum(g[1:2] - g_mean * g_mean, 0.0)     # (1, G)
        gc = jnp.dot(jnp.concatenate([g_mean, g_var], axis=0), mt_ref[...],
                     preferred_element_type=jnp.float32)       # (2, C)
        scale = ga_ref[...] * lax.rsqrt(gc[1:2] + EPS)         # (1, C)
        shift = be_ref[...] - gc[0:1] * scale                  # (1, C)

        out = jnp.maximum(y * scale + shift, 0.0)              # ReLU
        if add_state:                                          # fused skip add
            out = out + s_ref[0].astype(jnp.float32)
        out_ref[0] = out.astype(out_ref.dtype)

    in_specs = [
        pl.BlockSpec((1, Hp, Wp, Cin), lambda n: (n, 0, 0, 0)),
        pl.BlockSpec((k * k, Cin, C), lambda n: (0, 0, 0)),
    ]
    args = [x_pad, w_taps]
    if has_bias:
        in_specs.append(pl.BlockSpec((1, C), lambda n: (0, 0)))
        args.append(bias)
    in_specs += [
        pl.BlockSpec((1, C), lambda n: (0, 0)),
        pl.BlockSpec((1, C), lambda n: (0, 0)),
        pl.BlockSpec((C, G), lambda n: (0, 0)),
        pl.BlockSpec((G, C), lambda n: (0, 0)),
    ]
    args += [gamma, beta, m_mat, mt_mat]
    if add_state:
        in_specs.append(pl.BlockSpec((1, P, C), lambda n: (n, 0, 0)))
        args.append(state_flat)

    # explicit VMEM budget from the actual block sizes (double-buffered I/O +
    # weights + f32 temps), clamped safely below v7x's 64 MiB physical VMEM.
    in_block = Hp * Wp * Cin * x_pad.dtype.itemsize
    out_block = P * C * jnp.dtype(out_dtype).itemsize
    state_block = P * C * 2 if add_state else 0
    w_bytes = k * k * Cin * C * w_taps.dtype.itemsize
    scratch = 4 * P * C * 4
    est = 2 * (in_block + out_block + state_block) + 2 * w_bytes + scratch
    vmem_limit = int(min(max(est + (8 << 20), 32 << 20), 56 << 20))

    return pl.pallas_call(
        kernel,
        out_shape=jax.ShapeDtypeStruct((N, P, C), out_dtype),
        grid_spec=pltpu.PrefetchScalarGridSpec(
            num_scalar_prefetch=0,
            grid=(N,),
            in_specs=in_specs,
            out_specs=pl.BlockSpec((1, P, C), lambda n: (n, 0, 0)),
        ),
        compiler_params=pltpu.CompilerParams(
            dimension_semantics=("parallel",),
            vmem_limit_bytes=vmem_limit,
        ),
    )(*args)


# ----------------------------------------------------------------------------
# Parameter / layout helpers
# ----------------------------------------------------------------------------
def _w_to_taps(w_oihw):
    """torch Conv2d weight (Cout, Cin, Kh, Kw) -> (Kh*Kw, Cin, Cout) bf16 taps."""
    Cout, Cin, Kh, Kw = w_oihw.shape
    return (jnp.transpose(w_oihw, (2, 3, 1, 0))
            .reshape(Kh * Kw, Cin, Cout).astype(jnp.bfloat16))


def _group_matrices(C):
    """One-hot channel<->group membership matrices for GroupNorm(32, C)."""
    G = GROUPS
    cs = C // G
    ch_group = jnp.arange(C, dtype=jnp.int32) // cs
    M = (ch_group[:, None] == jnp.arange(G, dtype=jnp.int32)[None, :]).astype(jnp.float32)
    return M, M.T                                              # (C, G), (G, C)


def init_params(key, in_channels, out_channels, kernel_size=3, stride=1):
    assert out_channels % GROUPS == 0, "GroupNorm(32, C) requires C % 32 == 0"
    ks = jax.random.split(key, 6)
    C = out_channels
    w_in = 0.1 * jax.random.normal(
        ks[0], (C, in_channels, kernel_size, kernel_size), jnp.float32)
    b_in = 0.1 * jax.random.normal(ks[1], (C,), jnp.float32)
    w1 = 0.05 * jax.random.normal(ks[2], (C, C, 3, 3), jnp.float32)  # conv1: no bias
    gamma_in = 1.0 + 0.1 * jax.random.normal(ks[3], (C,), jnp.float32)
    beta_in = 0.1 * jax.random.normal(ks[4], (C,), jnp.float32)
    gamma1 = 1.0 + 0.1 * jax.random.normal(ks[5], (C,), jnp.float32)
    beta1 = jnp.zeros((C,), jnp.float32)
    M, Mt = _group_matrices(C)
    return dict(
        kernel_size=kernel_size, stride=stride, out_channels=C,
        w_in=_w_to_taps(w_in), b_in=b_in.reshape(1, C),
        gamma_in=gamma_in.reshape(1, C), beta_in=beta_in.reshape(1, C),
        w1=_w_to_taps(w1),
        gamma1=gamma1.reshape(1, C), beta1=beta1.reshape(1, C),
        gn_m=M, gn_mt=Mt,
    )


# ----------------------------------------------------------------------------
# Forward pass (mirrors CORblock_RT.forward; NCHW in / NCHW out)
# ----------------------------------------------------------------------------
def corblock_rt_forward(params, inp, state=None):
    # TODO(synk): the `inp is None` branch of the PyTorch module (calls .cuda()
    # on None) is dead/buggy code and is not translated.
    k, s, C = params["kernel_size"], params["stride"], params["out_channels"]
    N, _, H, W = inp.shape
    p = k // 2
    M, Mt = params["gn_m"], params["gn_mt"]

    x = jnp.transpose(inp, (0, 2, 3, 1)).astype(jnp.bfloat16)          # NHWC bf16
    xp = jnp.pad(x, ((0, 0), (p, p), (p, p), (0, 0)))
    Ho1 = H + 2 * p - k + 1                                            # stride-1 out
    Wo1 = W + 2 * p - k + 1

    # fuse the recurrent skip add into the first kernel when shapes line up
    state_flat = None
    if state is not None and s == 1:
        state_flat = (jnp.transpose(state, (0, 2, 3, 1))
                      .astype(jnp.bfloat16).reshape(N, Ho1 * Wo1, C))

    h = _conv_gn_relu(xp, params["w_in"], params["b_in"],
                      params["gamma_in"], params["beta_in"], M, Mt,
                      state_flat, k, Ho1, Wo1, out_dtype=jnp.bfloat16)
    h = h.reshape(N, Ho1, Wo1, C)

    if s > 1:
        # TODO(synk): strided conv_input is realized as stride-1 conv + output
        # subsample (identical result, extra compute); only stride=1 hits the
        # fully fused skip-add path.
        h = h[:, ::s, ::s, :]
        if state is not None:
            h = h + jnp.transpose(state, (0, 2, 3, 1)).astype(h.dtype)

    Ho, Wo = h.shape[1], h.shape[2]
    skip_p = jnp.pad(h, ((0, 0), (1, 1), (1, 1), (0, 0)))              # conv1 pad=1
    x2 = _conv_gn_relu(skip_p, params["w1"], None,                     # conv1: bias=False
                       params["gamma1"], params["beta1"], M, Mt,
                       None, 3, Ho, Wo, out_dtype=jnp.float32)
    x2 = x2.reshape(N, Ho, Wo, C)
    out_nchw = jnp.transpose(x2, (0, 3, 1, 2))                         # back to NCHW
    return out_nchw, out_nchw                                          # (output, state)


if __name__ == "__main__":
    key = jax.random.PRNGKey(0)
    kp, kx = jax.random.split(key)

    N, Cin, Cout, H, W = 2, 4, 32, 16, 16                              # small demo shapes
    params = init_params(kp, Cin, Cout, kernel_size=3, stride=1)
    x = jax.random.normal(kx, (N, Cin, H, W), jnp.float32)

    out, state = corblock_rt_forward(params, x, state=None)            # first timestep
    out = jax.block_until_ready(out)
    assert out.shape == (N, Cout, H, W)
    assert bool(jnp.all(jnp.isfinite(out)))
    assert bool(jnp.all(out >= 0.0))                                   # ReLU output

    out2, state2 = corblock_rt_forward(params, x, state=state)         # recurrent step
    out2 = jax.block_until_ready(out2)
    assert out2.shape == (N, Cout, H, W)
    assert bool(jnp.all(jnp.isfinite(out2)))
    assert bool(jnp.all(out2 >= 0.0))

    print("KERNEL_OK")
</pallas_src>

<mosaic_0001>
module attributes {stable_mosaic.version = 11 : i64} {
  func.func @kernel(%arg0: i32, %arg1: memref<1x18x18x4xbf16, #tpu.memory_space<vmem>>, %arg2: memref<9x4x32xbf16, #tpu.memory_space<vmem>>, %arg3: memref<1x32xf32, #tpu.memory_space<vmem>>, %arg4: memref<1x32xf32, #tpu.memory_space<vmem>>, %arg5: memref<1x32xf32, #tpu.memory_space<vmem>>, %arg6: memref<32x32xf32, #tpu.memory_space<vmem>>, %arg7: memref<32x32xf32, #tpu.memory_space<vmem>>, %arg8: memref<1x256x32xbf16, #tpu.memory_space<vmem>>) attributes {dimension_semantics = [#tpu.dimension_semantics<parallel>], iteration_bounds = array<i64: 2>, scalar_prefetch = 0 : i64, scratch_operands = 0 : i64, tpu.core_type = #tpu.core_type<tc>, window_params = [{transform_indices = @transform_0, window_bounds = array<i64: 1, 18, 18, 4>}, {pipeline_mode = #tpu.pipeline_mode<synchronous>, transform_indices = @transform_1, window_bounds = array<i64: 9, 4, 32>}, {pipeline_mode = #tpu.pipeline_mode<synchronous>, transform_indices = @transform_2, window_bounds = array<i64: 1, 32>}, {pipeline_mode = #tpu.pipeline_mode<synchronous>, transform_indices = @transform_3, window_bounds = array<i64: 1, 32>}, {pipeline_mode = #tpu.pipeline_mode<synchronous>, transform_indices = @transform_4, window_bounds = array<i64: 1, 32>}, {pipeline_mode = #tpu.pipeline_mode<synchronous>, transform_indices = @transform_5, window_bounds = array<i64: 32, 32>}, {pipeline_mode = #tpu.pipeline_mode<synchronous>, transform_indices = @transform_6, window_bounds = array<i64: 32, 32>}, {transform_indices = @transform_7, window_bounds = array<i64: 1, 256, 32>}]} {
    %c0 = arith.constant 0 : index
    %c0_0 = arith.constant 0 : index
    %c0_1 = arith.constant 0 : index
    %c0_2 = arith.constant 0 : index
    %0 = vector.load %arg1[%c0, %c0_0, %c0_1, %c0_2] : memref<1x18x18x4xbf16, #tpu.memory_space<vmem>>, vector<1x18x18x4xbf16>
    %1 = vector.shape_cast %0 : vector<1x18x18x4xbf16> to vector<18x18x4xbf16>
    %cst = arith.constant 0.000000e+00 : f32
    %2 = vector.broadcast %cst : f32 to vector<256x32xf32>
    %3 = vector.extract_strided_slice %1 {offsets = [0, 0, 0], sizes = [16, 16, 4], strides = [1, 1, 1]} : vector<18x18x4xbf16> to vector<16x16x4xbf16>
    %4 = vector.shape_cast %3 : vector<16x16x4xbf16> to vector<256x4xbf16>
    %c0_3 = arith.constant 0 : index
    %c0_4 = arith.constant 0 : index
    %c0_5 = arith.constant 0 : index
    %5 = vector.load %arg2[%c0_3, %c0_4, %c0_5] : memref<9x4x32xbf16, #tpu.memory_space<vmem>>, vector<1x4x32xbf16>
    %6 = vector.shape_cast %5 : vector<1x4x32xbf16> to vector<4x32xbf16>
    %cst_6 = arith.constant dense<0.000000e+00> : vector<256x32xf32>
    %7 = tpu.matmul %4, %6, %cst_6 {dimension_numbers = #tpu.dot_dimension_numbers<[1], [0], [0], [1], [0, 0, 1, 1], [], []>} : vector<256x4xbf16>, vector<4x32xbf16>, vector<256x32xf32> -> vector<256x32xf32>
    %8 = arith.addf %2, %7 : vector<256x32xf32>
    %9 = vector.extract_strided_slice %1 {offsets = [0, 1, 0], sizes = [16, 16, 4], strides = [1, 1, 1]} : vector<18x18x4xbf16> to vector<16x16x4xbf16>
    %10 = vector.shape_cast %9 : vector<16x16x4xbf16> to vector<256x4xbf16>
    %c1 = arith.constant 1 : index
    %c0_7 = arith.constant 0 : index
    %c0_8 = arith.constant 0 : index
    %11 = vector.load %arg2[%c1, %c0_7, %c0_8] : memref<9x4x32xbf16, #tpu.memory_space<vmem>>, vector<1x4x32xbf16>
    %12 = vector.shape_cast %11 : vector<1x4x32xbf16> to vector<4x32xbf16>
    %cst_9 = arith.constant dense<0.000000e+00> : vector<256x32xf32>
    %13 = tpu.matmul %10, %12, %cst_9 {dimension_numbers = #tpu.dot_dimension_numbers<[1], [0], [0], [1], [0, 0, 1, 1], [], []>} : vector<256x4xbf16>, vector<4x32xbf16>, vector<256x32xf32> -> vector<256x32xf32>
    %14 = arith.addf %8, %13 : vector<256x32xf32>
    %15 = vector.extract_strided_slice %1 {offsets = [0, 2, 0], sizes = [16, 16, 4], strides = [1, 1, 1]} : vector<18x18x4xbf16> to vector<16x16x4xbf16>
    %16 = vector.shape_cast %15 : vector<16x16x4xbf16> to vector<256x4xbf16>
    %c2 = arith.constant 2 : index
    %c0_10 = arith.constant 0 : index
    %c0_11 = arith.constant 0 : index
    %17 = vector.load %arg2[%c2, %c0_10, %c0_11] : memref<9x4x32xbf16, #tpu.memory_space<vmem>>, vector<1x4x32xbf16>
    %18 = vector.shape_cast %17 : vector<1x4x32xbf16> to vector<4x32xbf16>
    %cst_12 = arith.constant dense<0.000000e+00> : vector<256x32xf32>
    %19 = tpu.matmul %16, %18, %cst_12 {dimension_numbers = #tpu.dot_dimension_numbers<[1], [0], [0], [1], [0, 0, 1, 1], [], []>} : vector<256x4xbf16>, vector<4x32xbf16>, vector<256x32xf32> -> vector<256x32xf32>
    %20 = arith.addf %14, %19 : vector<256x32xf32>
    %21 = vector.extract_strided_slice %1 {offsets = [1, 0, 0], sizes = [16, 16, 4], strides = [1, 1, 1]} : vector<18x18x4xbf16> to vector<16x16x4xbf16>
    %22 = vector.shape_cast %21 : vector<16x16x4xbf16> to vector<256x4xbf16>
    %c3 = arith.constant 3 : index
    %c0_13 = arith.constant 0 : index
    %c0_14 = arith.constant 0 : index
    %23 = vector.load %arg2[%c3, %c0_13, %c0_14] : memref<9x4x32xbf16, #tpu.memory_space<vmem>>, vector<1x4x32xbf16>
    %24 = vector.shape_cast %23 : vector<1x4x32xbf16> to vector<4x32xbf16>
    %cst_15 = arith.constant dense<0.000000e+00> : vector<256x32xf32>
    %25 = tpu.matmul %22, %24, %cst_15 {dimension_numbers = #tpu.dot_dimension_numbers<[1], [0], [0], [1], [0, 0, 1, 1], [], []>} : vector<256x4xbf16>, vector<4x32xbf16>, vector<256x32xf32> -> vector<256x32xf32>
    %26 = arith.addf %20, %25 : vector<256x32xf32>
    %27 = vector.extract_strided_slice %1 {offsets = [1, 1, 0], sizes = [16, 16, 4], strides = [1, 1, 1]} : vector<18x18x4xbf16> to vector<16x16x4xbf16>
    %28 = vector.shape_cast %27 : vector<16x16x4xbf16> to vector<256x4xbf16>
    %c4 = arith.constant 4 : index
    %c0_16 = arith.constant 0 : index
    %c0_17 = arith.constant 0 : index
    %29 = vector.load %arg2[%c4, %c0_16, %c0_17] : memref<9x4x32xbf16, #tpu.memory_space<vmem>>, vector<1x4x32xbf16>
    %30 = vector.shape_cast %29 : vector<1x4x32xbf16> to vector<4x32xbf16>
    %cst_18 = arith.constant dense<0.000000e+00> : vector<256x32xf32>
    %31 = tpu.matmul %28, %30, %cst_18 {dimension_numbers = #tpu.dot_dimension_numbers<[1], [0], [0], [1], [0, 0, 1, 1], [], []>} : vector<256x4xbf16>, vector<4x32xbf16>, vector<256x32xf32> -> vector<256x32xf32>
    %32 = arith.addf %26, %31 : vector<256x32xf32>
    %33 = vector.extract_strided_slice %1 {offsets = [1, 2, 0], sizes = [16, 16, 4], strides = [1, 1, 1]} : vector<18x18x4xbf16> to vector<16x16x4xbf16>
    %34 = vector.shape_cast %33 : vector<16x16x4xbf16> to vector<256x4xbf16>
    %c5 = arith.constant 5 : index
    %c0_19 = arith.constant 0 : index
    %c0_20 = arith.constant 0 : index
    %35 = vector.load %arg2[%c5, %c0_19, %c0_20] : memref<9x4x32xbf16, #tpu.memory_space<vmem>>, vector<1x4x32xbf16>
    %36 = vector.shape_cast %35 : vector<1x4x32xbf16> to vector<4x32xbf16>
    %cst_21 = arith.constant dense<0.000000e+00> : vector<256x32xf32>
    %37 = tpu.matmul %34, %36, %cst_21 {dimension_numbers = #tpu.dot_dimension_numbers<[1], [0], [0], [1], [0, 0, 1, 1], [], []>} : vector<256x4xbf16>, vector<4x32xbf16>, vector<256x32xf32> -> vector<256x32xf32>
    %38 = arith.addf %32, %37 : vector<256x32xf32>
    %39 = vector.extract_strided_slice %1 {offsets = [2, 0, 0], sizes = [16, 16, 4], strides = [1, 1, 1]} : vector<18x18x4xbf16> to vector<16x16x4xbf16>
    %40 = vector.shape_cast %39 : vector<16x16x4xbf16> to vector<256x4xbf16>
    %c6 = arith.constant 6 : index
    %c0_22 = arith.constant 0 : index
    %c0_23 = arith.constant 0 : index
    %41 = vector.load %arg2[%c6, %c0_22, %c0_23] : memref<9x4x32xbf16, #tpu.memory_space<vmem>>, vector<1x4x32xbf16>
    %42 = vector.shape_cast %41 : vector<1x4x32xbf16> to vector<4x32xbf16>
    %cst_24 = arith.constant dense<0.000000e+00> : vector<256x32xf32>
    %43 = tpu.matmul %40, %42, %cst_24 {dimension_numbers = #tpu.dot_dimension_numbers<[1], [0], [0], [1], [0, 0, 1, 1], [], []>} : vector<256x4xbf16>, vector<4x32xbf16>, vector<256x32xf32> -> vector<256x32xf32>
    %44 = arith.addf %38, %43 : vector<256x32xf32>
    %45 = vector.extract_strided_slice %1 {offsets = [2, 1, 0], sizes = [16, 16, 4], strides = [1, 1, 1]} : vector<18x18x4xbf16> to vector<16x16x4xbf16>
    %46 = vector.shape_cast %45 : vector<16x16x4xbf16> to vector<256x4xbf16>
    %c7 = arith.constant 7 : index
    %c0_25 = arith.constant 0 : index
    %c0_26 = arith.constant 0 : index
    %47 = vector.load %arg2[%c7, %c0_25, %c0_26] : memref<9x4x32xbf16, #tpu.memory_space<vmem>>, vector<1x4x32xbf16>
    %48 = vector.shape_cast %47 : vector<1x4x32xbf16> to vector<4x32xbf16>
    %cst_27 = arith.constant dense<0.000000e+00> : vector<256x32xf32>
    %49 = tpu.matmul %46, %48, %cst_27 {dimension_numbers = #tpu.dot_dimension_numbers<[1], [0], [0], [1], [0, 0, 1, 1], [], []>} : vector<256x4xbf16>, vector<4x32xbf16>, vector<256x32xf32> -> vector<256x32xf32>
    %50 = arith.addf %44, %49 : vector<256x32xf32>
    %51 = vector.extract_strided_slice %1 {offsets = [2, 2, 0], sizes = [16, 16, 4], strides = [1, 1, 1]} : vector<18x18x4xbf16> to vector<16x16x4xbf16>
    %52 = vector.shape_cast %51 : vector<16x16x4xbf16> to vector<256x4xbf16>
    %c8 = arith.constant 8 : index
    %c0_28 = arith.constant 0 : index
    %c0_29 = arith.constant 0 : index
    %53 = vector.load %arg2[%c8, %c0_28, %c0_29] : memref<9x4x32xbf16, #tpu.memory_space<vmem>>, vector<1x4x32xbf16>
    %54 = vector.shape_cast %53 : vector<1x4x32xbf16> to vector<4x32xbf16>
    %cst_30 = arith.constant dense<0.000000e+00> : vector<256x32xf32>
    %55 = tpu.matmul %52, %54, %cst_30 {dimension_numbers = #tpu.dot_dimension_numbers<[1], [0], [0], [1], [0, 0, 1, 1], [], []>} : vector<256x4xbf16>, vector<4x32xbf16>, vector<256x32xf32> -> vector<256x32xf32>
    %56 = arith.addf %50, %55 : vector<256x32xf32>
    %c0_31 = arith.constant 0 : index
    %c0_32 = arith.constant 0 : index
    %57 = vector.load %arg3[%c0_31, %c0_32] : memref<1x32xf32, #tpu.memory_space<vmem>>, vector<1x32xf32>
    %58 = vector.broadcast %57 : vector<1x32xf32> to vector<256x32xf32>
    %59 = arith.addf %56, %58 : vector<256x32xf32>
    %cst_33 = arith.constant dense<0.000000e+00> : vector<32xf32>
    %60 = vector.multi_reduction <add>, %59, %cst_33 [0] : vector<256x32xf32> to vector<32xf32>
    %61 = vector.shape_cast %60 : vector<32xf32> to vector<1x32xf32>
    %62 = arith.mulf %59, %59 : vector<256x32xf32>
    %cst_34 = arith.constant dense<0.000000e+00> : vector<32xf32>
    %63 = vector.multi_reduction <add>, %62, %cst_34 [0] : vector<256x32xf32> to vector<32xf32>
    %64 = vector.shape_cast %63 : vector<32xf32> to vector<1x32xf32>
    %65 = tpu.concatenate %61, %64 in 0 : vector<1x32xf32>, vector<1x32xf32> -> vector<2x32xf32>
    %c0_35 = arith.constant 0 : index
    %c0_36 = arith.constant 0 : index
    %66 = vector.load %arg6[%c0_35, %c0_36] : memref<32x32xf32, #tpu.memory_space<vmem>>, vector<32x32xf32>
    %cst_37 = arith.constant dense<0.000000e+00> : vector<2x32xf32>
    %67 = tpu.matmul %65, %66, %cst_37 {dimension_numbers = #tpu.dot_dimension_numbers<[1], [0], [0], [1], [0, 0, 1, 1], [], []>} : vector<2x32xf32>, vector<32x32xf32>, vector<2x32xf32> -> vector<2x32xf32>
    %cst_38 = arith.constant 3.906250e-03 : f32
    %68 = vector.broadcast %cst_38 : f32 to vector<2x32xf32>
    %69 = arith.mulf %67, %68 : vector<2x32xf32>
    %70 = vector.extract_strided_slice %69 {offsets = [0, 0], sizes = [1, 32], strides = [1, 1]} : vector<2x32xf32> to vector<1x32xf32>
    %71 = vector.extract_strided_slice %69 {offsets = [1, 0], sizes = [1, 32], strides = [1, 1]} : vector<2x32xf32> to vector<1x32xf32>
    %72 = arith.mulf %70, %70 : vector<1x32xf32>
    %73 = arith.subf %71, %72 : vector<1x32xf32>
    %cst_39 = arith.constant 0.000000e+00 : f32
    %74 = vector.broadcast %cst_39 : f32 to vector<1x32xf32>
    %75 = arith.maximumf %73, %74 : vector<1x32xf32>
    %76 = tpu.concatenate %70, %75 in 0 : vector<1x32xf32>, vector<1x32xf32> -> vector<2x32xf32>
    %c0_40 = arith.constant 0 : index
    %c0_41 = arith.constant 0 : index
    %77 = vector.load %arg7[%c0_40, %c0_41] : memref<32x32xf32, #tpu.memory_space<vmem>>, vector<32x32xf32>
    %cst_42 = arith.constant dense<0.000000e+00> : vector<2x32xf32>
    %78 = tpu.matmul %76, %77, %cst_42 {dimension_numbers = #tpu.dot_dimension_numbers<[1], [0], [0], [1], [0, 0, 1, 1], [], []>} : vector<2x32xf32>, vector<32x32xf32>, vector<2x32xf32> -> vector<2x32xf32>
    %c0_43 = arith.constant 0 : index
    %c0_44 = arith.constant 0 : index
    %79 = vector.load %arg4[%c0_43, %c0_44] : memref<1x32xf32, #tpu.memory_space<vmem>>, vector<1x32xf32>
    %80 = vector.extract_strided_slice %78 {offsets = [1, 0], sizes = [1, 32], strides = [1, 1]} : vector<2x32xf32> to vector<1x32xf32>
    %cst_45 = arith.constant 9.99999974E-6 : f32
    %81 = vector.broadcast %cst_45 : f32 to vector<1x32xf32>
    %82 = arith.addf %80, %81 : vector<1x32xf32>
    %83 = math.rsqrt %82 : vector<1x32xf32>
    %84 = arith.mulf %79, %83 : vector<1x32xf32>
    %c0_46 = arith.constant 0 : index
    %c0_47 = arith.constant 0 : index
    %85 = vector.load %arg5[%c0_46, %c0_47] : memref<1x32xf32, #tpu.memory_space<vmem>>, vector<1x32xf32>
    %86 = vector.extract_strided_slice %78 {offsets = [0, 0], sizes = [1, 32], strides = [1, 1]} : vector<2x32xf32> to vector<1x32xf32>
    %87 = arith.mulf %86, %84 : vector<1x32xf32>
    %88 = arith.subf %85, %87 : vector<1x32xf32>
    %89 = vector.broadcast %84 : vector<1x32xf32> to vector<256x32xf32>
    %90 = arith.mulf %59, %89 : vector<256x32xf32>
    %91 = vector.broadcast %88 : vector<1x32xf32> to vector<256x32xf32>
    %92 = arith.addf %90, %91 : vector<256x32xf32>
    %cst_48 = arith.constant 0.000000e+00 : f32
    %93 = vector.broadcast %cst_48 : f32 to vector<256x32xf32>
    %94 = arith.maximumf %92, %93 : vector<256x32xf32>
    %95 = arith.truncf %94 : vector<256x32xf32> to vector<256x32xbf16>
    %c0_49 = arith.constant 0 : index
    %c0_50 = arith.constant 0 : index
    %c0_51 = arith.constant 0 : index
    %96 = vector.load %arg8[%c0_49, %c0_50, %c0_51] : memref<1x256x32xbf16, #tpu.memory_space<vmem>>, vector<1x256x32xbf16>
    %97 = vector.shape_cast %96 : vector<1x256x32xbf16> to vector<256x32xbf16>
    %98 = vector.shape_cast %95 : vector<256x32xbf16> to vector<1x256x32xbf16>
    tpu.vector_store %arg8[%c0_49, %c0_50, %c0_51], %98 {strides = array<i32>} : memref<1x256x32xbf16, #tpu.memory_space<vmem>>, vector<1x256x32xbf16>,
    return
  }
  func.func @transform_0(%arg0: i32) -> (i32, i32, i32, i32) {
    %c0_i32 = arith.constant 0 : i32
    %c0_i32_0 = arith.constant 0 : i32
    %c0_i32_1 = arith.constant 0 : i32
    %c0_i32_2 = arith.constant 0 : i32
    return %arg0, %c0_i32, %c0_i32_0, %c0_i32_1 : i32, i32, i32, i32
  }
  func.func @transform_1(%arg0: i32) -> (i32, i32, i32) {
    %c0_i32 = arith.constant 0 : i32
    %c0_i32_0 = arith.constant 0 : i32
    %c0_i32_1 = arith.constant 0 : i32
    %c0_i32_2 = arith.constant 0 : i32
    return %c0_i32, %c0_i32_0, %c0_i32_1 : i32, i32, i32
  }
  func.func @transform_2(%arg0: i32) -> (i32, i32) {
    %c0_i32 = arith.constant 0 : i32
    %c0_i32_0 = arith.constant 0 : i32
    %c0_i32_1 = arith.constant 0 : i32
    return %c0_i32, %c0_i32_0 : i32, i32
  }
  func.func @transform_3(%arg0: i32) -> (i32, i32) {
    %c0_i32 = arith.constant 0 : i32
    %c0_i32_0 = arith.constant 0 : i32
    %c0_i32_1 = arith.constant 0 : i32
    return %c0_i32, %c0_i32_0 : i32, i32
  }
  func.func @transform_4(%arg0: i32) -> (i32, i32) {
    %c0_i32 = arith.constant 0 : i32
    %c0_i32_0 = arith.constant 0 : i32
    %c0_i32_1 = arith.constant 0 : i32
    return %c0_i32, %c0_i32_0 : i32, i32
  }
  func.func @transform_5(%arg0: i32) -> (i32, i32) {
    %c0_i32 = arith.constant 0 : i32
    %c0_i32_0 = arith.constant 0 : i32
    %c0_i32_1 = arith.constant 0 : i32
    return %c0_i32, %c0_i32_0 : i32, i32
  }
  func.func @transform_6(%arg0: i32) -> (i32, i32) {
    %c0_i32 = arith.constant 0 : i32
    %c0_i32_0 = arith.constant 0 : i32
    %c0_i32_1 = arith.constant 0 : i32
    return %c0_i32, %c0_i32_0 : i32, i32
  }
  func.func @transform_7(%arg0: i32) -> (i32, i32, i32) {
    %c0_i32 = arith.constant 0 : i32
    %c0_i32_0 = arith.constant 0 : i32
    %c0_i32_1 = arith.constant 0 : i32
    return %arg0, %c0_i32, %c0_i32_0 : i32, i32, i32
  }
}

</mosaic_0001>

<llo_original>
// kernel: tpu_custom_call.1
$region0: #{tpu_custom_call.1}
  #allocation0 [shape = 'u32[]', space=smem, size = 0x4, offset = 0x4, fixed_abs, tag = 'smem constant byte address 0x4 - core index']
  #allocation1 [shape = 'u32[72,128]{1,0:T(1,128)}', space=vmem, size = 0x9000, scoped, tag = 'internal scratch']
  %s0 = inlined_call_operand.vmem [shape: bf16[2,18,18,4], index: 0, kind: input, shape index: {}]
  %s1 = inlined_call_operand.vmem [shape: bf16[9,4,32], index: 1, kind: input, shape index: {}]
  %s2 = inlined_call_operand.vmem [shape: f32[1,32], index: 2, kind: input, shape index: {}]
  %s3 = inlined_call_operand.vmem [shape: f32[1,32], index: 3, kind: input, shape index: {}]
  %s4 = inlined_call_operand.vmem [shape: f32[1,32], index: 4, kind: input, shape index: {}]
  %s5 = inlined_call_operand.vmem [shape: f32[32,32], index: 5, kind: input, shape index: {}]
  %s6 = inlined_call_operand.vmem [shape: f32[32,32], index: 6, kind: input, shape index: {}]
  %s7 = inlined_call_operand.vmem [shape: bf16[2,256,32], index: 7, kind: output, shape index: {}]
  %s8 = sld [smem:[#allocation0]]
  $region61: #{tpu_custom_call.1} parent=0
    _
  %s10 = ssub.s32 1, %s8
  %s11 = scalar_select 0, %s10, %s8
  loop: start=0, step=1, limit=4
  $region2: #{tpu_custom_call.1} parent=0 // loop_pre_header
    _
  $region3: #{tpu_custom_call.1} parent=0 // loop_header
    %s13 = sphi 0, %s17
    %p14 = scmp.ge.s32.totalorder %s13, 4
    %s23 = sphi 0, %s25
    %s26 = sphi 0, %s23
    %s27 = sphi 0, %s26
    %s43 = sphi 0, %s27
    %s47 = sphi 0, %s47
    %s49 = sphi 0, %s47
    %s50 = sphi 0, %s49
    %s64 = sphi 0, %s50
    %s68 = sphi 0, %s68
    %s70 = sphi 0, %s68
    %s71 = sphi 0, %s70
    %s85 = sphi 0, %s71
    %s89 = sphi 0, %s89
    %s91 = sphi 0, %s89
    %s92 = sphi 0, %s91
    %s106 = sphi 0, %s92
    %s110 = sphi 0, %s110
    %s112 = sphi 0, %s110
    %s113 = sphi 0, %s112
    %s127 = sphi 0, %s113
    %s131 = sphi 0, %s131
    %s133 = sphi 0, %s131
    %s134 = sphi 0, %s133
    %s148 = sphi 0, %s134
    %s152 = sphi 0, %s152
    %s154 = sphi 0, %s152
    %s155 = sphi 0, %s154
    %s169 = sphi 0, %s155
    %s175 = sphi 0, %s177
    %s178 = sphi 0, %s175
    %s179 = sphi 0, %s178
    %s195 = sphi 0, %s179
  $region4: #{tpu_custom_call.1} parent=0 // loop_header_branch
    %16 = sbr.rel (%p14) target = $region8
  $region5: #{tpu_custom_call.1} parent=0 // loop_body
    %s18 = ssub.s32 %s13, 1
    %s19 = ssub.s32 %s13, 2
    %s20 = sadd.s32 %s13, 1
    %s21 = ssub.s32 %s13, %s20
    %p22 = scmp.eq.s32.totalorder %s21, 0
    %s24 = sadd.s32 %s23, 1
    %s25 = scalar_select %p22, %s23, %s24
    %p28 = pneg %p22
    %p29 = scmp.eq.s32.totalorder %s13, 1
    %p30 = por %p28, %p29
    %p31 = scmp.ne.s32.totalorder %s23, %s26
    %p32 = scmp.eq.s32.totalorder %s13, 0
    %p33 = por %p31, %p32
    %p34 = scmp.ne.s32.totalorder %s23, %s26
    %p35 = scmp.eq.s32.totalorder %s18, 1
    %p36 = por %p34, %p35
    %p37 = scmp.ne.s32.totalorder %s26, %s27
    %p38 = scmp.eq.s32.totalorder %s18, 0
    %p39 = por %p37, %p38
    %p40 = scmp.ne.s32.totalorder %s26, %s27
    %p41 = scmp.eq.s32.totalorder %s19, 1
    %p42 = por %p40, %p41
    %p44 = scmp.ne.s32.totalorder %s27, %s43
    %p45 = scmp.eq.s32.totalorder %s19, 0
    %p46 = por %p44, %p45
    %s48 = sadd.s32 %s47, 1
    %p51 = scmp.eq.s32.totalorder %s13, 1
    %p52 = scmp.ne.s32.totalorder %s47, %s49
    %p53 = scmp.eq.s32.totalorder %s13, 0
    %p54 = por %p52, %p53
    %p55 = scmp.ne.s32.totalorder %s47, %s49
    %p56 = scmp.eq.s32.totalorder %s18, 1
    %p57 = por %p55, %p56
    %p58 = scmp.ne.s32.totalorder %s49, %s50
    %p59 = scmp.eq.s32.totalorder %s18, 0
    %p60 = por %p58, %p59
    %p61 = scmp.ne.s32.totalorder %s49, %s50
    %p62 = scmp.eq.s32.totalorder %s19, 1
    %p63 = por %p61, %p62
    %p65 = scmp.ne.s32.totalorder %s50, %s64
    %p66 = scmp.eq.s32.totalorder %s19, 0
    %p67 = por %p65, %p66
    %s69 = sadd.s32 %s68, 1
    %p72 = scmp.eq.s32.totalorder %s13, 1
    %p73 = scmp.ne.s32.totalorder %s68, %s70
    %p74 = scmp.eq.s32.totalorder %s13, 0
    %p75 = por %p73, %p74
    %p76 = scmp.ne.s32.totalorder %s68, %s70
    %p77 = scmp.eq.s32.totalorder %s18, 1
    %p78 = por %p76, %p77
    %p79 = scmp.ne.s32.totalorder %s70, %s71
    %p80 = scmp.eq.s32.totalorder %s18, 0
    %p81 = por %p79, %p80
    %p82 = scmp.ne.s32.totalorder %s70, %s71
    %p83 = scmp.eq.s32.totalorder %s19, 1
    %p84 = por %p82, %p83
    %p86 = scmp.ne.s32.totalorder %s71, %s85
    %p87 = scmp.eq.s32.totalorder %s19, 0
    %p88 = por %p86, %p87
    %s90 = sadd.s32 %s89, 1
    %p93 = scmp.eq.s32.totalorder %s13, 1
    %p94 = scmp.ne.s32.totalorder %s89, %s91
    %p95 = scmp.eq.s32.totalorder %s13, 0
    %p96 = por %p94, %p95
    %p97 = scmp.ne.s32.totalorder %s89, %s91
    %p98 = scmp.eq.s32.totalorder %s18, 1
    %p99 = por %p97, %p98
    %p100 = scmp.ne.s32.totalorder %s91, %s92
    %p101 = scmp.eq.s32.totalorder %s18, 0
    %p102 = por %p100, %p101
    %p103 = scmp.ne.s32.totalorder %s91, %s92
    %p104 = scmp.eq.s32.totalorder %s19, 1
    %p105 = por %p103, %p104
    %p107 = scmp.ne.s32.totalorder %s92, %s106
    %p108 = scmp.eq.s32.totalorder %s19, 0
    %p109 = por %p107, %p108
    %s111 = sadd.s32 %s110, 1
    %p114 = scmp.eq.s32.totalorder %s13, 1
    %p115 = scmp.ne.s32.totalorder %s110, %s112
    %p116 = scmp.eq.s32.totalorder %s13, 0
    %p117 = por %p115, %p116
    %p118 = scmp.ne.s32.totalorder %s110, %s112
    %p119 = scmp.eq.s32.totalorder %s18, 1
    %p120 = por %p118, %p119
    %p121 = scmp.ne.s32.totalorder %s112, %s113
    %p122 = scmp.eq.s32.totalorder %s18, 0
    %p123 = por %p121, %p122
    %p124 = scmp.ne.s32.totalorder %s112, %s113
    %p125 = scmp.eq.s32.totalorder %s19, 1
    %p126 = por %p124, %p125
    %p128 = scmp.ne.s32.totalorder %s113, %s127
    %p129 = scmp.eq.s32.totalorder %s19, 0
    %p130 = por %p128, %p129
    %s132 = sadd.s32 %s131, 1
    %p135 = scmp.eq.s32.totalorder %s13, 1
    %p136 = scmp.ne.s32.totalorder %s131, %s133
    %p137 = scmp.eq.s32.totalorder %s13, 0
    %p138 = por %p136, %p137
    %p139 = scmp.ne.s32.totalorder %s131, %s133
    %p140 = scmp.eq.s32.totalorder %s18, 1
    %p141 = por %p139, %p140
    %p142 = scmp.ne.s32.totalorder %s133, %s134
    %p143 = scmp.eq.s32.totalorder %s18, 0
    %p144 = por %p142, %p143
    %p145 = scmp.ne.s32.totalorder %s133, %s134
    %p146 = scmp.eq.s32.totalorder %s19, 1
    %p147 = por %p145, %p146
    %p149 = scmp.ne.s32.totalorder %s134, %s148
    %p150 = scmp.eq.s32.totalorder %s19, 0
    %p151 = por %p149, %p150
    %s153 = sadd.s32 %s152, 1
    %p156 = scmp.eq.s32.totalorder %s13, 1
    %p157 = scmp.ne.s32.totalorder %s152, %s154
    %p158 = scmp.eq.s32.totalorder %s13, 0
    %p159 = por %p157, %p158
    %p160 = scmp.ne.s32.totalorder %s152, %s154
    %p161 = scmp.eq.s32.totalorder %s18, 1
    %p162 = por %p160, %p161
    %p163 = scmp.ne.s32.totalorder %s154, %s155
    %p164 = scmp.eq.s32.totalorder %s18, 0
    %p165 = por %p163, %p164
    %p166 = scmp.ne.s32.totalorder %s154, %s155
    %p167 = scmp.eq.s32.totalorder %s19, 1
    %p168 = por %p166, %p167
    %p170 = scmp.ne.s32.totalorder %s155, %s169
    %p171 = scmp.eq.s32.totalorder %s19, 0
    %p172 = por %p170, %p171
    %s173 = ssub.s32 %s13, %s20
    %p174 = scmp.eq.s32.totalorder %s173, 0
    %s176 = sadd.s32 %s175, 1
    %s177 = scalar_select %p174, %s175, %s176
    %p180 = pneg %p174
    %p181 = scmp.eq.s32.totalorder %s13, 1
    %p182 = por %p180, %p181
    %p183 = scmp.ne.s32.totalorder %s175, %s178
    %p184 = scmp.eq.s32.totalorder %s13, 0
    %p185 = por %p183, %p184
    %p186 = scmp.ne.s32.totalorder %s175, %s178
    %p187 = scmp.eq.s32.totalorder %s18, 1
    %p188 = por %p186, %p187
    %p189 = scmp.ne.s32.totalorder %s178, %s179
    %p190 = scmp.eq.s32.totalorder %s18, 0
    %p191 = por %p189, %p190
    %p192 = scmp.ne.s32.totalorder %s178, %s179
    %p193 = scmp.eq.s32.totalorder %s19, 1
    %p194 = por %p192, %p193
    %p196 = scmp.ne.s32.totalorder %s179, %s195
    %p197 = scmp.eq.s32.totalorder %s19, 0
    %p198 = por %p196, %p197
    %p199 = scmp.le.s32.totalorder 1, %s13
    %p200 = scmp.lt.s32.totalorder %s13, 3
    %p201 = pnand %p199, %p200
    %p202 = pneg %p201
    // Predicated region
    $region9: #{tpu_custom_call.1} parent=5 // pred_check
      _
    $region10: #{tpu_custom_call.1} parent=5 // pred_check_branch
      %204 = sbr.rel (%p201) target = $region12
    $region11: #{tpu_custom_call.1} parent=5 // pred_region
      %s205 = ssub.s32 %s13, 1
      // Predicated region
      $region13: #{tpu_custom_call.1} parent=11 // pred_check
        %p206 = pneg %p60
      $region14: #{tpu_custom_call.1} parent=11 // pred_check_branch
        %208 = sbr.rel (%p206) target = $region16
      $region15: #{tpu_custom_call.1} parent=11 // pred_region
        _
      $region16: #{tpu_custom_call.1} parent=11 // pred_fallthru
        _
      // Predicated region
      $region17: #{tpu_custom_call.1} parent=11 // pred_check
        %p209 = pneg %p81
      $region18: #{tpu_custom_call.1} parent=11 // pred_check_branch
        %211 = sbr.rel (%p209) target = $region20
      $region19: #{tpu_custom_call.1} parent=11 // pred_region
        _
      $region20: #{tpu_custom_call.1} parent=11 // pred_fallthru
        _
      // Predicated region
      $region21: #{tpu_custom_call.1} parent=11 // pred_check
        %p212 = pneg %p102
      $region22: #{tpu_custom_call.1} parent=11 // pred_check_branch
        %214 = sbr.rel (%p212) target = $region24
      $region23: #{tpu_custom_call.1} parent=11 // pred_region
        _
      $region24: #{tpu_custom_call.1} parent=11 // pred_fallthru
        _
      // Predicated region
      $region25: #{tpu_custom_call.1} parent=11 // pred_check
        %p215 = pneg %p123
      $region26: #{tpu_custom_call.1} parent=11 // pred_check_branch
        %217 = sbr.rel (%p215) target = $region28
      $region27: #{tpu_custom_call.1} parent=11 // pred_region
        _
      $region28: #{tpu_custom_call.1} parent=11 // pred_fallthru
        _
      // Predicated region
      $region29: #{tpu_custom_call.1} parent=11 // pred_check
        %p218 = pneg %p144
      $region30: #{tpu_custom_call.1} parent=11 // pred_check_branch
        %220 = sbr.rel (%p218) target = $region32
      $region31: #{tpu_custom_call.1} parent=11 // pred_region
        _
      $region32: #{tpu_custom_call.1} parent=11 // pred_fallthru
        _
      // Predicated region
      $region33: #{tpu_custom_call.1} parent=11 // pred_check
        %p221 = pneg %p165
      $region34: #{tpu_custom_call.1} parent=11 // pred_check_branch
        %223 = sbr.rel (%p221) target = $region36
      $region35: #{tpu_custom_call.1} parent=11 // pred_region
        _
      $region36: #{tpu_custom_call.1} parent=11 // pred_fallthru
        _
    $region12: #{tpu_custom_call.1} parent=5 // pred_fallthru
      _
    %p224 = scmp.lt.s32.totalorder %s13, 2
    // Predicated region
    $region37: #{tpu_custom_call.1} parent=5 // pred_check
      %p225 = pneg %p224
    $region38: #{tpu_custom_call.1} parent=5 // pred_check_branch
      %227 = sbr.rel (%p225) target = $region40
    $region39: #{tpu_custom_call.1} parent=5 // pred_region
      // Predicated region
      $region41: #{tpu_custom_call.1} parent=39 // pred_check
        %p228 = pneg %p33
      $region42: #{tpu_custom_call.1} parent=39 // pred_check_branch
        %230 = sbr.rel (%p228) target = $region44
      $region43: #{tpu_custom_call.1} parent=39 // pred_region
        %p231 = scmp.lt.s32.totalorder %s13, 1
        %s232 = scalar_select %p231, %s13, 1
        %s233 = smul.addr %s232, 54
        %s234 = smul.addr %s233, 4
        %s235 = scalar_lea.vmem %s0, %s234
      $region44: #{tpu_custom_call.1} parent=39 // pred_fallthru
        _
    $region40: #{tpu_custom_call.1} parent=5 // pred_fallthru
      _
    %p236 = scmp.le.s32.totalorder 1, %s13
    %p237 = scmp.lt.s32.totalorder %s13, 3
    %p238 = pnand %p236, %p237
    %p239 = pneg %p238
    // Predicated region
    $region45: #{tpu_custom_call.1} parent=5 // pred_check
      _
    $region46: #{tpu_custom_call.1} parent=5 // pred_check_branch
      %241 = sbr.rel (%p238) target = $region48
    $region47: #{tpu_custom_call.1} parent=5 // pred_region
      %s242 = ssub.s32 %s13, 1
      %p243 = scmp.lt.s32.totalorder %s18, 1
      %s244 = scalar_select %p243, %s18, 1
      %s245 = smul.addr %s244, 54
      %s246 = smul.addr %s245, 4
      %s247 = scalar_lea.vmem %s0, %s246
      %p248 = pneg %p39
      %p249 = pneg %p36
      %p250 = pneg %p60
      %p251 = pneg %p57
      %p252 = pneg %p81
      %p253 = pneg %p78
      %p254 = pneg %p102
      %p255 = pneg %p99
      %p256 = pneg %p123
      %p257 = pneg %p120
      %p258 = pneg %p144
      %p259 = pneg %p141
      %p260 = pneg %p165
      %p261 = pneg %p162
      %p262 = pneg %p191
      %p263 = pneg %p188
      %p264 = scmp.lt.s32.totalorder %s18, 1
      %s265 = scalar_select %p264, %s18, 1
      %s266 = smul.addr %s265, 32
      %s267 = smul.addr %s266, 4
      %s268 = scalar_lea.vmem %s7, %s267
      %p269 = scmp.lt.s32.totalorder %s18, 1
      %s270 = scalar_select %p269, %s18, 1
      %s271 = smul.addr %s270, 54
      %s272 = smul.addr %s271, 4
      %s273 = scalar_lea.vmem %s0, %s272
      %p274 = scmp.lt.s32.totalorder %s18, 1
      %s275 = scalar_select %p274, %s18, 1
      %s276 = smul.addr %s275, 32
      %s277 = smul.addr %s276, 4
      %s278 = scalar_lea.vmem %s7, %s277
      %v280 = vld [vmem:[%s273] sm:$0xf]
      %v281 = vld [vmem:[%s273 + $0x4] sm:$0xf]
      %v282 = vld [vmem:[%s273 + $0x8] sm:$0x1]
      %v283 = vld [vmem:[%s273 + $0xc] sm:$0xf]
      %v284 = vld [vmem:[%s273 + $0x10] sm:$0xf]
      %v285 = vld [vmem:[%s273 + $0x14] sm:$0x1]
      %v286 = vld [vmem:[%s273 + $0x18] sm:$0xf]
      %v287 = vld [vmem:[%s273 + $0x1c] sm:$0xf]
      %v288 = vld [vmem:[%s273 + $0x20] sm:$0x1]
      %v289 = vld [vmem:[%s273 + $0x24] sm:$0xf]
      %v290 = vld [vmem:[%s273 + $0x28] sm:$0xf]
      %v291 = vld [vmem:[%s273 + $0x2c] sm:$0x1]
      %v292 = vld [vmem:[%s273 + $0x30] sm:$0xf]
      %v293 = vld [vmem:[%s273 + $0x34] sm:$0xf]
      %v294 = vld [vmem:[%s273 + $0x38] sm:$0x1]
      %v295 = vld [vmem:[%s273 + $0x3c] sm:$0xf]
      %v296 = vld [vmem:[%s273 + $0x40] sm:$0xf]
      %v297 = vld [vmem:[%s273 + $0x44] sm:$0x1]
      %v298 = vld [vmem:[%s273 + $0x48] sm:$0xf]
      %v299 = vld [vmem:[%s273 + $0x4c] sm:$0xf]
      %v300 = vld [vmem:[%s273 + $0x50] sm:$0x1]
      %v301 = vld [vmem:[%s273 + $0x54] sm:$0xf]
      %v302 = vld [vmem:[%s273 + $0x58] sm:$0xf]
      %v303 = vld [vmem:[%s273 + $0x5c] sm:$0x1]
      %v304 = vld [vmem:[%s273 + $0x60] sm:$0xf]
      %v305 = vld [vmem:[%s273 + $0x64] sm:$0xf]
      %v306 = vld [vmem:[%s273 + $0x68] sm:$0x1]
      %v307 = vld [vmem:[%s273 + $0x6c] sm:$0xf]
      %v308 = vld [vmem:[%s273 + $0x70] sm:$0xf]
      %v309 = vld [vmem:[%s273 + $0x74] sm:$0x1]
      %v310 = vld [vmem:[%s273 + $0x78] sm:$0xf]
      %v311 = vld [vmem:[%s273 + $0x7c] sm:$0xf]
      %v312 = vld [vmem:[%s273 + $0x80] sm:$0x1]
      %v313 = vld [vmem:[%s273 + $0x84] sm:$0xf]
      %v314 = vld [vmem:[%s273 + $0x88] sm:$0xf]
      %v315 = vld [vmem:[%s273 + $0x8c] sm:$0x1]
      %v316 = vld [vmem:[%s273 + $0x90] sm:$0xf]
      %v317 = vld [vmem:[%s273 + $0x94] sm:$0xf]
      %v318 = vld [vmem:[%s273 + $0x98] sm:$0x1]
      %v319 = vld [vmem:[%s273 + $0x9c] sm:$0xf]
      %v320 = vld [vmem:[%s273 + $0xa0] sm:$0xf]
      %v321 = vld [vmem:[%s273 + $0xa4] sm:$0x1]
      %v322 = vld [vmem:[%s273 + $0xa8] sm:$0xf]
      %v323 = vld [vmem:[%s273 + $0xac] sm:$0xf]
      %v324 = vld [vmem:[%s273 + $0xb0] sm:$0x1]
      %v325 = vld [vmem:[%s273 + $0xb4] sm:$0xf]
      %v326 = vld [vmem:[%s273 + $0xb8] sm:$0xf]
      %v327 = vld [vmem:[%s273 + $0xbc] sm:$0x1]
      %v328 = vld [vmem:[%s273 + $0xc0] sm:$0xf]
      %v329 = vld [vmem:[%s273 + $0xc4] sm:$0xf]
      %v330 = vld [vmem:[%s273 + $0xc8] sm:$0x1]
      %v331 = vld [vmem:[%s273 + $0xcc] sm:$0xf]
      %v332 = vld [vmem:[%s273 + $0xd0] sm:$0xf]
      %v333 = vld [vmem:[%s273 + $0xd4] sm:$0x1]
      %v334 = vld [vmem:[%s1] sm:$0x3]
      %vm335 = vsmask.f32 3328
      %vm336 = vsmask.f32 7440
      %vm337 = vmor %vm335, %vm336
      %v339 = vshrl.u32 %v280, 16
      %v341 = vrot.slane %v339, 4
      %v342 = vshll.u32 %v280, 16
      %v344 = vrot.slane %v342, 5
      %v345 = vor.u32 %v341, %v344
      %v346 = vrot.slane %v345, 4
      %v348 = vshll.u32 %v281, 16
      %v350 = vrot.slane %v348, 5
      %v351 = vsel %vm337, %v346, %v350
      %v352 = vshrl.u32 %v281, 16
      %v354 = vrot.slane %v352, 4
      %v355 = vor.u32 %v354, %v350
      %v356 = vrot.slane %v355, 4
      %v358 = vshll.u32 %v282, 16
      %v360 = vrot.slane %v358, 5
      %v361 = vsel %vm337, %v356, %v360
      %v363 = vshrl.u32 %v283, 16
      %v365 = vrot.slane %v363, 4
      %v366 = vshll.u32 %v283, 16
      %v368 = vrot.slane %v366, 5
      %v369 = vor.u32 %v365, %v368
      %v370 = vrot.slane %v369, 4
      %v372 = vshll.u32 %v284, 16
      %v374 = vrot.slane %v372, 5
      %v375 = vsel %vm337, %v370, %v374
      %v376 = vshrl.u32 %v284, 16
      %v378 = vrot.slane %v376, 4
      %v379 = vor.u32 %v378, %v374
      %v380 = vrot.slane %v379, 4
      %v382 = vshll.u32 %v285, 16
      %v384 = vrot.slane %v382, 5
      %v385 = vsel %vm337, %v380, %v384
      %v387 = vshrl.u32 %v286, 16
      %v389 = vrot.slane %v387, 4
      %v390 = vshll.u32 %v286, 16
      %v392 = vrot.slane %v390, 5
      %v393 = vor.u32 %v389, %v392
      %v394 = vrot.slane %v393, 4
      %v396 = vshll.u32 %v287, 16
      %v398 = vrot.slane %v396, 5
      %v399 = vsel %vm337, %v394, %v398
      %v400 = vshrl.u32 %v287, 16
      %v402 = vrot.slane %v400, 4
      %v403 = vor.u32 %v402, %v398
      %v404 = vrot.slane %v403, 4
      %v406 = vshll.u32 %v288, 16
      %v408 = vrot.slane %v406, 5
      %v409 = vsel %vm337, %v404, %v408
      %v411 = vshrl.u32 %v289, 16
      %v413 = vrot.slane %v411, 4
      %v414 = vshll.u32 %v289, 16
      %v416 = vrot.slane %v414, 5
      %v417 = vor.u32 %v413, %v416
      %v418 = vrot.slane %v417, 4
      %v420 = vshll.u32 %v290, 16
      %v422 = vrot.slane %v420, 5
      %v423 = vsel %vm337, %v418, %v422
      %v424 = vshrl.u32 %v290, 16
      %v426 = vrot.slane %v424, 4
      %v427 = vor.u32 %v426, %v422
      %v428 = vrot.slane %v427, 4
      %v430 = vshll.u32 %v291, 16
      %v432 = vrot.slane %v430, 5
      %v433 = vsel %vm337, %v428, %v432
      %v435 = vshrl.u32 %v292, 16
      %v437 = vrot.slane %v435, 4
      %v438 = vshll.u32 %v292, 16
      %v440 = vrot.slane %v438, 5
      %v441 = vor.u32 %v437, %v440
      %v442 = vrot.slane %v441, 4
      %v444 = vshll.u32 %v293, 16
      %v446 = vrot.slane %v444, 5
      %v447 = vsel %vm337, %v442, %v446
      %v448 = vshrl.u32 %v293, 16
      %v450 = vrot.slane %v448, 4
      %v451 = vor.u32 %v450, %v446
      %v452 = vrot.slane %v451, 4
      %v454 = vshll.u32 %v294, 16
      %v456 = vrot.slane %v454, 5
      %v457 = vsel %vm337, %v452, %v456
      %v459 = vshrl.u32 %v295, 16
      %v461 = vrot.slane %v459, 4
      %v462 = vshll.u32 %v295, 16
      %v464 = vrot.slane %v462, 5
      %v465 = vor.u32 %v461, %v464
      %v466 = vrot.slane %v465, 4
      %v468 = vshll.u32 %v296, 16
      %v470 = vrot.slane %v468, 5
      %v471 = vsel %vm337, %v466, %v470
      %v472 = vshrl.u32 %v296, 16
      %v474 = vrot.slane %v472, 4
      %v475 = vor.u32 %v474, %v470
      %v476 = vrot.slane %v475, 4
      %v478 = vshll.u32 %v297, 16
      %v480 = vrot.slane %v478, 5
      %v481 = vsel %vm337, %v476, %v480
      %v483 = vshrl.u32 %v298, 16
      %v485 = vrot.slane %v483, 4
      %v486 = vshll.u32 %v298, 16
      %v488 = vrot.slane %v486, 5
      %v489 = vor.u32 %v485, %v488
      %v490 = vrot.slane %v489, 4
      %v492 = vshll.u32 %v299, 16
      %v494 = vrot.slane %v492, 5
      %v495 = vsel %vm337, %v490, %v494
      %v496 = vshrl.u32 %v299, 16
      %v498 = vrot.slane %v496, 4
      %v499 = vor.u32 %v498, %v494
      %v500 = vrot.slane %v499, 4
      %v502 = vshll.u32 %v300, 16
      %v504 = vrot.slane %v502, 5
      %v505 = vsel %vm337, %v500, %v504
      %v507 = vshrl.u32 %v301, 16
      %v509 = vrot.slane %v507, 4
      %v510 = vshll.u32 %v301, 16
      %v512 = vrot.slane %v510, 5
      %v513 = vor.u32 %v509, %v512
      %v514 = vrot.slane %v513, 4
      %v516 = vshll.u32 %v302, 16
      %v518 = vrot.slane %v516, 5
      %v519 = vsel %vm337, %v514, %v518
      %v520 = vshrl.u32 %v302, 16
      %v522 = vrot.slane %v520, 4
      %v523 = vor.u32 %v522, %v518
      %v524 = vrot.slane %v523, 4
      %v526 = vshll.u32 %v303, 16
      %v528 = vrot.slane %v526, 5
      %v529 = vsel %vm337, %v524, %v528
      %v531 = vshrl.u32 %v304, 16
      %v533 = vrot.slane %v531, 4
      %v534 = vshll.u32 %v304, 16
      %v536 = vrot.slane %v534, 5
      %v537 = vor.u32 %v533, %v536
      %v538 = vrot.slane %v537, 4
      %v540 = vshll.u32 %v305, 16
      %v542 = vrot.slane %v540, 5
      %v543 = vsel %vm337, %v538, %v542
      %v544 = vshrl.u32 %v305, 16
      %v546 = vrot.slane %v544, 4
      %v547 = vor.u32 %v546, %v542
      %v548 = vrot.slane %v547, 4
      %v550 = vshll.u32 %v306, 16
      %v552 = vrot.slane %v550, 5
      %v553 = vsel %vm337, %v548, %v552
      %v555 = vshrl.u32 %v307, 16
      %v557 = vrot.slane %v555, 4
      %v558 = vshll.u32 %v307, 16
      %v560 = vrot.slane %v558, 5
      %v561 = vor.u32 %v557, %v560
      %v562 = vrot.slane %v561, 4
      %v564 = vshll.u32 %v308, 16
      %v566 = vrot.slane %v564, 5
      %v567 = vsel %vm337, %v562, %v566
      %v568 = vshrl.u32 %v308, 16
      %v570 = vrot.slane %v568, 4
      %v571 = vor.u32 %v570, %v566
      %v572 = vrot.slane %v571, 4
      %v574 = vshll.u32 %v309, 16
      %v576 = vrot.slane %v574, 5
      %v577 = vsel %vm337, %v572, %v576
      %v579 = vshrl.u32 %v310, 16
      %v581 = vrot.slane %v579, 4
      %v582 = vshll.u32 %v310, 16
      %v584 = vrot.slane %v582, 5
      %v585 = vor.u32 %v581, %v584
      %v586 = vrot.slane %v585, 4
      %v588 = vshll.u32 %v311, 16
      %v590 = vrot.slane %v588, 5
      %v591 = vsel %vm337, %v586, %v590
      %v592 = vshrl.u32 %v311, 16
      %v594 = vrot.slane %v592, 4
      %v595 = vor.u32 %v594, %v590
      %v596 = vrot.slane %v595, 4
      %v598 = vshll.u32 %v312, 16
      %v600 = vrot.slane %v598, 5
      %v601 = vsel %vm337, %v596, %v600
      %v603 = vshrl.u32 %v313, 16
      %v605 = vrot.slane %v603, 4
      %v606 = vshll.u32 %v313, 16
      %v608 = vrot.slane %v606, 5
      %v609 = vor.u32 %v605, %v608
      %v610 = vrot.slane %v609, 4
      %v612 = vshll.u32 %v314, 16
      %v614 = vrot.slane %v612, 5
      %v615 = vsel %vm337, %v610, %v614
      %v616 = vshrl.u32 %v314, 16
      %v618 = vrot.slane %v616, 4
      %v619 = vor.u32 %v618, %v614
      %v620 = vrot.slane %v619, 4
      %v622 = vshll.u32 %v315, 16
      %v624 = vrot.slane %v622, 5
      %v625 = vsel %vm337, %v620, %v624
      %v627 = vshrl.u32 %v316, 16
      %v629 = vrot.slane %v627, 4
      %v630 = vshll.u32 %v316, 16
      %v632 = vrot.slane %v630, 5
      %v633 = vor.u32 %v629, %v632
      %v634 = vrot.slane %v633, 4
      %v636 = vshll.u32 %v317, 16
      %v638 = vrot.slane %v636, 5
      %v639 = vsel %vm337, %v634, %v638
      %v640 = vshrl.u32 %v317, 16
      %v642 = vrot.slane %v640, 4
      %v643 = vor.u32 %v642, %v638
      %v644 = vrot.slane %v643, 4
      %v646 = vshll.u32 %v318, 16
      %v648 = vrot.slane %v646, 5
      %v649 = vsel %vm337, %v644, %v648
      %v651 = vshrl.u32 %v319, 16
      %v653 = vrot.slane %v651, 4
      %v654 = vshll.u32 %v319, 16
      %v656 = vrot.slane %v654, 5
      %v657 = vor.u32 %v653, %v656
      %v658 = vrot.slane %v657, 4
      %v660 = vshll.u32 %v320, 16
      %v662 = vrot.slane %v660, 5
      %v663 = vsel %vm337, %v658, %v662
      %v664 = vshrl.u32 %v320, 16
      %v666 = vrot.slane %v664, 4
      %v667 = vor.u32 %v666, %v662
      %v668 = vrot.slane %v667, 4
      %v670 = vshll.u32 %v321, 16
      %v672 = vrot.slane %v670, 5
      %v673 = vsel %vm337, %v668, %v672
      %v675 = vshrl.u32 %v322, 16
      %v677 = vrot.slane %v675, 4
      %v678 = vshll.u32 %v322, 16
      %v680 = vrot.slane %v678, 5
      %v681 = vor.u32 %v677, %v680
      %v682 = vrot.slane %v681, 4
      %v684 = vshll.u32 %v323, 16
      %v686 = vrot.slane %v684, 5
      %v687 = vsel %vm337, %v682, %v686
      %v688 = vshrl.u32 %v323, 16
      %v690 = vrot.slane %v688, 4
      %v691 = vor.u32 %v690, %v686
      %v692 = vrot.slane %v691, 4
      %v694 = vshll.u32 %v324, 16
      %v696 = vrot.slane %v694, 5
      %v697 = vsel %vm337, %v692, %v696
      %v699 = vshrl.u32 %v325, 16
      %v701 = vrot.slane %v699, 4
      %v702 = vshll.u32 %v325, 16
      %v704 = vrot.slane %v702, 5
      %v705 = vor.u32 %v701, %v704
      %v706 = vrot.slane %v705, 4
      %v708 = vshll.u32 %v326, 16
      %v710 = vrot.slane %v708, 5
      %v711 = vsel %vm337, %v706, %v710
      %v712 = vshrl.u32 %v326, 16
      %v714 = vrot.slane %v712, 4
      %v715 = vor.u32 %v714, %v710
      %v716 = vrot.slane %v715, 4
      %v718 = vshll.u32 %v327, 16
      %v720 = vrot.slane %v718, 5
      %v721 = vsel %vm337, %v716, %v720
      %s722 = scalar_lea.vmem %s1, 2
      %v723 = vld [vmem:[%s722] sm:$0x3]
      %v724 = vunpack.c.l.b16 %v351
      %v725 = vunpack.c.l.b16 %v361
      %v726 = vunpack.c.l.b16 %v375
      %v727 = vunpack.c.l.b16 %v385
      %v728 = vunpack.c.l.b16 %v399
      %v729 = vunpack.c.l.b16 %v409
      %v730 = vunpack.c.l.b16 %v423
      %v731 = vunpack.c.l.b16 %v433
      %v732 = vunpack.c.l.b16 %v447
      %v733 = vunpack.c.l.b16 %v457
      %v734 = vunpack.c.l.b16 %v471
      %v735 = vunpack.c.l.b16 %v481
      %v736 = vunpack.c.l.b16 %v495
      %v737 = vunpack.c.l.b16 %v505
      %v738 = vunpack.c.l.b16 %v519
      %v739 = vunpack.c.l.b16 %v529
      %v740 = vunpack.c.l.b16 %v543
      %v741 = vunpack.c.l.b16 %v553
      %v742 = vunpack.c.l.b16 %v567
      %v743 = vunpack.c.l.b16 %v577
      %v744 = vunpack.c.l.b16 %v591
      %v745 = vunpack.c.l.b16 %v601
      %v746 = vunpack.c.l.b16 %v615
      %v747 = vunpack.c.l.b16 %v625
      %v748 = vunpack.c.l.b16 %v639
      %v749 = vunpack.c.l.b16 %v649
      %v750 = vunpack.c.l.b16 %v663
      %v751 = vunpack.c.l.b16 %v673
      %v752 = vunpack.c.l.b16 %v687
      %v753 = vunpack.c.l.b16 %v697
      %v754 = vunpack.c.l.b16 %v711
      %v755 = vunpack.c.l.b16 %v721
      %v756 = vpack.c.b16 %v725, %v724
      %v757 = vpack.c.b16 %v727, %v726
      %v758 = vpack.c.b16 %v729, %v728
      %v759 = vpack.c.b16 %v731, %v730
      %v760 = vpack.c.b16 %v733, %v732
      %v761 = vpack.c.b16 %v735, %v734
      %v762 = vpack.c.b16 %v737, %v736
      %v763 = vpack.c.b16 %v739, %v738
      %v764 = vpack.c.b16 %v741, %v740
      %v765 = vpack.c.b16 %v743, %v742
      %v766 = vpack.c.b16 %v745, %v744
      %v767 = vpack.c.b16 %v747, %v746
      %v768 = vpack.c.b16 %v749, %v748
      %v769 = vpack.c.b16 %v751, %v750
      %v770 = vpack.c.b16 %v753, %v752
      %v771 = vpack.c.b16 %v755, %v754
      %vm772 = vcmask 31744
      %v774 = vsel %vm772, %v756, 0
      %v777 = vsel %vm772, %v757, 0
      %v780 = vsel %vm772, %v758, 0
      %v783 = vsel %vm772, %v759, 0
      %v786 = vsel %vm772, %v760, 0
      %v789 = vsel %vm772, %v761, 0
      %v792 = vsel %vm772, %v762, 0
      %v795 = vsel %vm772, %v763, 0
      %v798 = vsel %vm772, %v764, 0
      %v801 = vsel %vm772, %v765, 0
      %v804 = vsel %vm772, %v766, 0
      %v807 = vsel %vm772, %v767, 0
      %v810 = vsel %vm772, %v768, 0
      %v813 = vsel %vm772, %v769, 0
      %v816 = vsel %vm772, %v770, 0
      %v819 = vsel %vm772, %v771, 0
      %vm821 = vcmask 1041408
      %v823 = vsel %vm821, %v723, 0
      %825 = vmatpush.bf16.msra.mxu0 0
      %826 = vmatpush.bf16.msra.mxu0 0
      %827 = vmatpush.bf16.msra.mxu0 0
      %828 = vmatpush.bf16.msra.mxu0 0
      %829 = vmatpush.bf16.msra.mxu0 0
      %830 = vmatpush.bf16.msra.mxu0 0
      %831 = vmatpush.bf16.msra.mxu0 0
      %832 = vmatpush.bf16.msra.mxu0 %v823
      %833 = vmatmul.bf16.gmra.mxu0 %v774
      %v834 = vpop.f32.mrf.mxu0
      %v835 = vadd.f32 0.0, %v834
      %v836 = vpop.f32.mrf.mxu0
      %v837 = vadd.f32 0.0, %v836
      %838 = vmatmul.bf16.gmra.mxu0 %v777
      %v839 = vpop.f32.mrf.mxu0
      %v840 = vadd.f32 0.0, %v839
      %v841 = vpop.f32.mrf.mxu0
      %v842 = vadd.f32 0.0, %v841
      %843 = vmatmul.bf16.gmra.mxu0 %v780
      %v844 = vpop.f32.mrf.mxu0
      %v845 = vadd.f32 0.0, %v844
      %v846 = vpop.f32.mrf.mxu0
      %v847 = vadd.f32 0.0, %v846
      %848 = vmatmul.bf16.gmra.mxu0 %v783
      %v849 = vpop.f32.mrf.mxu0
      %v850 = vadd.f32 0.0, %v849
      %v851 = vpop.f32.mrf.mxu0
      %v852 = vadd.f32 0.0, %v851
      %853 = vmatmul.bf16.gmra.mxu0 %v786
      %v854 = vpop.f32.mrf.mxu0
      %v855 = vadd.f32 0.0, %v854
      %v856 = vpop.f32.mrf.mxu0
      %v857 = vadd.f32 0.0, %v856
      %858 = vmatmul.bf16.gmra.mxu0 %v789
      %v859 = vpop.f32.mrf.mxu0
      %v860 = vadd.f32 0.0, %v859
      %v861 = vpop.f32.mrf.mxu0
      %v862 = vadd.f32 0.0, %v861
      %863 = vmatmul.bf16.gmra.mxu0 %v792
      %v864 = vpop.f32.mrf.mxu0
      %v865 = vadd.f32 0.0, %v864
      %v866 = vpop.f32.mrf.mxu0
      %v867 = vadd.f32 0.0, %v866
      %868 = vmatmul.bf16.gmra.mxu0 %v795
      %v869 = vpop.f32.mrf.mxu0
      %v870 = vadd.f32 0.0, %v869
      %v871 = vpop.f32.mrf.mxu0
      %v872 = vadd.f32 0.0, %v871
      %873 = vmatmul.bf16.gmra.mxu0 %v798
      %v874 = vpop.f32.mrf.mxu0
      %v875 = vadd.f32 0.0, %v874
      %v876 = vpop.f32.mrf.mxu0
      %v877 = vadd.f32 0.0, %v876
      %878 = vmatmul.bf16.gmra.mxu0 %v801
      %v879 = vpop.f32.mrf.mxu0
      %v880 = vadd.f32 0.0, %v879
      %v881 = vpop.f32.mrf.mxu0
      %v882 = vadd.f32 0.0, %v881
      %883 = vmatmul.bf16.gmra.mxu0 %v804
      %v884 = vpop.f32.mrf.mxu0
      %v885 = vadd.f32 0.0, %v884
      %v886 = vpop.f32.mrf.mxu0
      %v887 = vadd.f32 0.0, %v886
      %888 = vmatmul.bf16.gmra.mxu0 %v807
      %v889 = vpop.f32.mrf.mxu0
      %v890 = vadd.f32 0.0, %v889
      %v891 = vpop.f32.mrf.mxu0
      %v892 = vadd.f32 0.0, %v891
      %893 = vmatmul.bf16.gmra.mxu0 %v810
      %v894 = vpop.f32.mrf.mxu0
      %v895 = vadd.f32 0.0, %v894
      %v896 = vpop.f32.mrf.mxu0
      %v897 = vadd.f32 0.0, %v896
      %898 = vmatmul.bf16.gmra.mxu0 %v813
      %v899 = vpop.f32.mrf.mxu0
      %v900 = vadd.f32 0.0, %v899
      %v901 = vpop.f32.mrf.mxu0
      %v902 = vadd.f32 0.0, %v901
      %903 = vmatmul.bf16.gmra.mxu0 %v816
      %v904 = vpop.f32.mrf.mxu0
      %v905 = vadd.f32 0.0, %v904
      %v906 = vpop.f32.mrf.mxu0
      %v907 = vadd.f32 0.0, %v906
      %908 = vmatmul.bf16.gmra.mxu0 %v819
      %v909 = vpop.f32.mrf.mxu0
      %v910 = vadd.f32 0.0, %v909
      %v911 = vpop.f32.mrf.mxu0
      %v912 = vadd.f32 0.0, %v911
      %913 = vdwg.mxu0
      %v946 = vunpack.c.l.b16 %v280
      %v947 = vunpack.c.l.b16 %v281
      %v948 = vunpack.c.l.b16 %v283
      %v949 = vunpack.c.l.b16 %v284
      %v950 = vunpack.c.l.b16 %v286
      %v951 = vunpack.c.l.b16 %v287
      %v952 = vunpack.c.l.b16 %v289
      %v953 = vunpack.c.l.b16 %v290
      %v954 = vunpack.c.l.b16 %v292
      %v955 = vunpack.c.l.b16 %v293
      %v956 = vunpack.c.l.b16 %v295
      %v957 = vunpack.c.l.b16 %v296
      %v958 = vunpack.c.l.b16 %v298
      %v959 = vunpack.c.l.b16 %v299
      %v960 = vunpack.c.l.b16 %v301
      %v961 = vunpack.c.l.b16 %v302
      %v962 = vunpack.c.l.b16 %v304
      %v963 = vunpack.c.l.b16 %v305
      %v964 = vunpack.c.l.b16 %v307
      %v965 = vunpack.c.l.b16 %v308
      %v966 = vunpack.c.l.b16 %v310
      %v967 = vunpack.c.l.b16 %v311
      %v968 = vunpack.c.l.b16 %v313
      %v969 = vunpack.c.l.b16 %v314
      %v970 = vunpack.c.l.b16 %v316
      %v971 = vunpack.c.l.b16 %v317
      %v972 = vunpack.c.l.b16 %v319
      %v973 = vunpack.c.l.b16 %v320
      %v974 = vunpack.c.l.b16 %v322
      %v975 = vunpack.c.l.b16 %v323
      %v976 = vunpack.c.l.b16 %v325
      %v977 = vunpack.c.l.b16 %v326
      %v978 = vpack.c.b16 %v947, %v946
      %v979 = vpack.c.b16 %v949, %v948
      %v980 = vpack.c.b16 %v951, %v950
      %v981 = vpack.c.b16 %v953, %v952
      %v982 = vpack.c.b16 %v955, %v954
      %v983 = vpack.c.b16 %v957, %v956
      %v984 = vpack.c.b16 %v959, %v958
      %v985 = vpack.c.b16 %v961, %v960
      %v986 = vpack.c.b16 %v963, %v962
      %v987 = vpack.c.b16 %v965, %v964
      %v988 = vpack.c.b16 %v967, %v966
      %v989 = vpack.c.b16 %v969, %v968
      %v990 = vpack.c.b16 %v971, %v970
      %v991 = vpack.c.b16 %v973, %v972
      %v992 = vpack.c.b16 %v975, %v974
      %v993 = vpack.c.b16 %v977, %v976
      %v995 = vsel %vm772, %v978, 0
      %v998 = vsel %vm772, %v979, 0
      %v1001 = vsel %vm772, %v980, 0
      %v1004 = vsel %vm772, %v981, 0
      %v1007 = vsel %vm772, %v982, 0
      %v1010 = vsel %vm772, %v983, 0
      %v1013 = vsel %vm772, %v984, 0
      %v1016 = vsel %vm772, %v985, 0
      %v1019 = vsel %vm772, %v986, 0
      %v1022 = vsel %vm772, %v987, 0
      %v1025 = vsel %vm772, %v988, 0
      %v1028 = vsel %vm772, %v989, 0
      %v1031 = vsel %vm772, %v990, 0
      %v1034 = vsel %vm772, %v991, 0
      %v1037 = vsel %vm772, %v992, 0
      %v1040 = vsel %vm772, %v993, 0
      %v1043 = vsel %vm821, %v334, 0
      %1045 = vmatpush.bf16.msra.mxu0 0
      %1046 = vmatpush.bf16.msra.mxu0 0
      %1047 = vmatpush.bf16.msra.mxu0 0
      %1048 = vmatpush.bf16.msra.mxu0 0
      %1049 = vmatpush.bf16.msra.mxu0 0
      %1050 = vmatpush.bf16.msra.mxu0 0
      %1051 = vmatpush.bf16.msra.mxu0 0
      %1052 = vmatpush.bf16.msra.mxu0 %v1043
      %1053 = vmatmul.bf16.gmra.mxu0 %v995
      %v1054 = vpop.f32.mrf.mxu0
      %v1055 = vadd.f32 %v835, %v1054
      %v1056 = vpop.f32.mrf.mxu0
      %v1057 = vadd.f32 %v837, %v1056
      %1058 = vmatmul.bf16.gmra.mxu0 %v998
      %v1059 = vpop.f32.mrf.mxu0
      %v1060 = vadd.f32 %v840, %v1059
      %v1061 = vpop.f32.mrf.mxu0
      %v1062 = vadd.f32 %v842, %v1061
      %1063 = vmatmul.bf16.gmra.mxu0 %v1001
      %v1064 = vpop.f32.mrf.mxu0
      %v1065 = vadd.f32 %v845, %v1064
      %v1066 = vpop.f32.mrf.mxu0
      %v1067 = vadd.f32 %v847, %v1066
      %1068 = vmatmul.bf16.gmra.mxu0 %v1004
      %v1069 = vpop.f32.mrf.mxu0
      %v1070 = vadd.f32 %v850, %v1069
      %v1071 = vpop.f32.mrf.mxu0
      %v1072 = vadd.f32 %v852, %v1071
      %1073 = vmatmul.bf16.gmra.mxu0 %v1007
      %v1074 = vpop.f32.mrf.mxu0
      %v1075 = vadd.f32 %v855, %v1074
      %v1076 = vpop.f32.mrf.mxu0
      %v1077 = vadd.f32 %v857, %v1076
      %1078 = vmatmul.bf16.gmra.mxu0 %v1010
      %v1079 = vpop.f32.mrf.mxu0
      %v1080 = vadd.f32 %v860, %v1079
      %v1081 = vpop.f32.mrf.mxu0
      %v1082 = vadd.f32 %v862, %v1081
      %1083 = vmatmul.bf16.gmra.mxu0 %v1013
      %v1084 = vpop.f32.mrf.mxu0
      %v1085 = vadd.f32 %v865, %v1084
      %v1086 = vpop.f32.mrf.mxu0
      %v1087 = vadd.f32 %v867, %v1086
      %1088 = vmatmul.bf16.gmra.mxu0 %v1016
      %v1089 = vpop.f32.mrf.mxu0
      %v1090 = vadd.f32 %v870, %v1089
      %v1091 = vpop.f32.mrf.mxu0
      %v1092 = vadd.f32 %v872, %v1091
      %1093 = vmatmul.bf16.gmra.mxu0 %v1019
      %v1094 = vpop.f32.mrf.mxu0
      %v1095 = vadd.f32 %v875, %v1094
      %v1096 = vpop.f32.mrf.mxu0
      %v1097 = vadd.f32 %v877, %v1096
      %1098 = vmatmul.bf16.gmra.mxu0 %v1022
      %v1099 = vpop.f32.mrf.mxu0
      %v1100 = vadd.f32 %v880, %v1099
      %v1101 = vpop.f32.mrf.mxu0
      %v1102 = vadd.f32 %v882, %v1101
      %1103 = vmatmul.bf16.gmra.mxu0 %v1025
      %v1104 = vpop.f32.mrf.mxu0
      %v1105 = vadd.f32 %v885, %v1104
      %v1106 = vpop.f32.mrf.mxu0
      %v1107 = vadd.f32 %v887, %v1106
      %1108 = vmatmul.bf16.gmra.mxu0 %v1028
      %v1109 = vpop.f32.mrf.mxu0
      %v1110 = vadd.f32 %v890, %v1109
      %v1111 = vpop.f32.mrf.mxu0
      %v1112 = vadd.f32 %v892, %v1111
      %1113 = vmatmul.bf16.gmra.mxu0 %v1031
      %v1114 = vpop.f32.mrf.mxu0
      %v1115 = vadd.f32 %v895, %v1114
      %v1116 = vpop.f32.mrf.mxu0
      %v1117 = vadd.f32 %v897, %v1116
      %1118 = vmatmul.bf16.gmra.mxu0 %v1034
      %v1119 = vpop.f32.mrf.mxu0
      %v1120 = vadd.f32 %v900, %v1119
      %v1121 = vpop.f32.mrf.mxu0
      %v1122 = vadd.f32 %v902, %v1121
      %1123 = vmatmul.bf16.gmra.mxu0 %v1037
      %v1124 = vpop.f32.mrf.mxu0
      %v1125 = vadd.f32 %v905, %v1124
      %v1126 = vpop.f32.mrf.mxu0
      %v1127 = vadd.f32 %v907, %v1126
      %1128 = vmatmul.bf16.gmra.mxu0 %v1040
      %v1129 = vpop.f32.mrf.mxu0
      %v1130 = vadd.f32 %v910, %v1129
      %v1131 = vpop.f32.mrf.mxu0
      %v1132 = vadd.f32 %v912, %v1131
      %1133 = vdwg.mxu0
      %vm1150 = vcmask 1042432
      %vm1151 = vcmask 1046532
      %vm1152 = vmor %vm1150, %vm1151
      %v1153 = vrot.slane %v280, 5
      %v1154 = vrot.slane %v1153, 4
      %v1155 = vrot.slane %v281, 5
      %v1156 = vsel %vm1152, %v1154, %v1155
      %v1157 = vrot.slane %v1155, 4
      %v1158 = vrot.slane %v282, 5
      %v1159 = vsel %vm1152, %v1157, %v1158
      %v1160 = vrot.slane %v283, 5
      %v1161 = vrot.slane %v1160, 4
      %v1162 = vrot.slane %v284, 5
      %v1163 = vsel %vm1152, %v1161, %v1162
      %v1164 = vrot.slane %v1162, 4
      %v1165 = vrot.slane %v285, 5
      %v1166 = vsel %vm1152, %v1164, %v1165
      %v1167 = vrot.slane %v286, 5
      %v1168 = vrot.slane %v1167, 4
      %v1169 = vrot.slane %v287, 5
      %v1170 = vsel %vm1152, %v1168, %v1169
      %v1171 = vrot.slane %v1169, 4
      %v1172 = vrot.slane %v288, 5
      %v1173 = vsel %vm1152, %v1171, %v1172
      %v1174 = vrot.slane %v289, 5
      %v1175 = vrot.slane %v1174, 4
      %v1176 = vrot.slane %v290, 5
      %v1177 = vsel %vm1152, %v1175, %v1176
      %v1178 = vrot.slane %v1176, 4
      %v1179 = vrot.slane %v291, 5
      %v1180 = vsel %vm1152, %v1178, %v1179
      %v1181 = vrot.slane %v292, 5
      %v1182 = vrot.slane %v1181, 4
      %v1183 = vrot.slane %v293, 5
      %v1184 = vsel %vm1152, %v1182, %v1183
      %v1185 = vrot.slane %v1183, 4
      %v1186 = vrot.slane %v294, 5
      %v1187 = vsel %vm1152, %v1185, %v1186
      %v1188 = vrot.slane %v295, 5
      %v1189 = vrot.slane %v1188, 4
      %v1190 = vrot.slane %v296, 5
      %v1191 = vsel %vm1152, %v1189, %v1190
      %v1192 = vrot.slane %v1190, 4
      %v1193 = vrot.slane %v297, 5
      %v1194 = vsel %vm1152, %v1192, %v1193
      %v1195 = vrot.slane %v298, 5
      %v1196 = vrot.slane %v1195, 4
      %v1197 = vrot.slane %v299, 5
      %v1198 = vsel %vm1152, %v1196, %v1197
      %v1199 = vrot.slane %v1197, 4
      %v1200 = vrot.slane %v300, 5
      %v1201 = vsel %vm1152, %v1199, %v1200
      %v1202 = vrot.slane %v301, 5
      %v1203 = vrot.slane %v1202, 4
      %v1204 = vrot.slane %v302, 5
      %v1205 = vsel %vm1152, %v1203, %v1204
      %v1206 = vrot.slane %v1204, 4
      %v1207 = vrot.slane %v303, 5
      %v1208 = vsel %vm1152, %v1206, %v1207
      %v1209 = vrot.slane %v304, 5
      %v1210 = vrot.slane %v1209, 4
      %v1211 = vrot.slane %v305, 5
      %v1212 = vsel %vm1152, %v1210, %v1211
      %v1213 = vrot.slane %v1211, 4
      %v1214 = vrot.slane %v306, 5
      %v1215 = vsel %vm1152, %v1213, %v1214
      %v1216 = vrot.slane %v307, 5
      %v1217 = vrot.slane %v1216, 4
      %v1218 = vrot.slane %v308, 5
      %v1219 = vsel %vm1152, %v1217, %v1218
      %v1220 = vrot.slane %v1218, 4
      %v1221 = vrot.slane %v309, 5
      %v1222 = vsel %vm1152, %v1220, %v1221
      %v1223 = vrot.slane %v310, 5
      %v1224 = vrot.slane %v1223, 4
      %v1225 = vrot.slane %v311, 5
      %v1226 = vsel %vm1152, %v1224, %v1225
      %v1227 = vrot.slane %v1225, 4
      %v1228 = vrot.slane %v312, 5
      %v1229 = vsel %vm1152, %v1227, %v1228
      %v1230 = vrot.slane %v313, 5
      %v1231 = vrot.slane %v1230, 4
      %v1232 = vrot.slane %v314, 5
      %v1233 = vsel %vm1152, %v1231, %v1232
      %v1234 = vrot.slane %v1232, 4
      %v1235 = vrot.slane %v315, 5
      %v1236 = vsel %vm1152, %v1234, %v1235
      %v1237 = vrot.slane %v316, 5
      %v1238 = vrot.slane %v1237, 4
      %v1239 = vrot.slane %v317, 5
      %v1240 = vsel %vm1152, %v1238, %v1239
      %v1241 = vrot.slane %v1239, 4
      %v1242 = vrot.slane %v318, 5
      %v1243 = vsel %vm1152, %v1241, %v1242
      %v1244 = vrot.slane %v319, 5
      %v1245 = vrot.slane %v1244, 4
      %v1246 = vrot.slane %v320, 5
      %v1247 = vsel %vm1152, %v1245, %v1246
      %v1248 = vrot.slane %v1246, 4
      %v1249 = vrot.slane %v321, 5
      %v1250 = vsel %vm1152, %v1248, %v1249
      %v1251 = vrot.slane %v322, 5
      %v1252 = vrot.slane %v1251, 4
      %v1253 = vrot.slane %v323, 5
      %v1254 = vsel %vm1152, %v1252, %v1253
      %v1255 = vrot.slane %v1253, 4
      %v1256 = vrot.slane %v324, 5
      %v1257 = vsel %vm1152, %v1255, %v1256
      %v1258 = vrot.slane %v325, 5
      %v1259 = vrot.slane %v1258, 4
      %v1260 = vrot.slane %v326, 5
      %v1261 = vsel %vm1152, %v1259, %v1260
      %v1262 = vrot.slane %v1260, 4
      %v1263 = vrot.slane %v327, 5
      %v1264 = vsel %vm1152, %v1262, %v1263
      %s1265 = scalar_lea.vmem %s1, 4
      %v1266 = vld [vmem:[%s1265] sm:$0x3]
      %v1267 = vunpack.c.l.b16 %v1156
      %v1268 = vunpack.c.l.b16 %v1159
      %v1269 = vunpack.c.l.b16 %v1163
      %v1270 = vunpack.c.l.b16 %v1166
      %v1271 = vunpack.c.l.b16 %v1170
      %v1272 = vunpack.c.l.b16 %v1173
      %v1273 = vunpack.c.l.b16 %v1177
      %v1274 = vunpack.c.l.b16 %v1180
      %v1275 = vunpack.c.l.b16 %v1184
      %v1276 = vunpack.c.l.b16 %v1187
      %v1277 = vunpack.c.l.b16 %v1191
      %v1278 = vunpack.c.l.b16 %v1194
      %v1279 = vunpack.c.l.b16 %v1198
      %v1280 = vunpack.c.l.b16 %v1201
      %v1281 = vunpack.c.l.b16 %v1205
      %v1282 = vunpack.c.l.b16 %v1208
      %v1283 = vunpack.c.l.b16 %v1212
      %v1284 = vunpack.c.l.b16 %v1215
      %v1285 = vunpack.c.l.b16 %v1219
      %v1286 = vunpack.c.l.b16 %v1222
      %v1287 = vunpack.c.l.b16 %v1226
      %v1288 = vunpack.c.l.b16 %v1229
      %v1289 = vunpack.c.l.b16 %v1233
      %v1290 = vunpack.c.l.b16 %v1236
      %v1291 = vunpack.c.l.b16 %v1240
      %v1292 = vunpack.c.l.b16 %v1243
      %v1293 = vunpack.c.l.b16 %v1247
      %v1294 = vunpack.c.l.b16 %v1250
      %v1295 = vunpack.c.l.b16 %v1254
      %v1296 = vunpack.c.l.b16 %v1257
      %v1297 = vunpack.c.l.b16 %v1261
      %v1298 = vunpack.c.l.b16 %v1264
      %v1299 = vpack.c.b16 %v1268, %v1267
      %v1300 = vpack.c.b16 %v1270, %v1269
      %v1301 = vpack.c.b16 %v1272, %v1271
      %v1302 = vpack.c.b16 %v1274, %v1273
      %v1303 = vpack.c.b16 %v1276, %v1275
      %v1304 = vpack.c.b16 %v1278, %v1277
      %v1305 = vpack.c.b16 %v1280, %v1279
      %v1306 = vpack.c.b16 %v1282, %v1281
      %v1307 = vpack.c.b16 %v1284, %v1283
      %v1308 = vpack.c.b16 %v1286, %v1285
      %v1309 = vpack.c.b16 %v1288, %v1287
      %v1310 = vpack.c.b16 %v1290, %v1289
      %v1311 = vpack.c.b16 %v1292, %v1291
      %v1312 = vpack.c.b16 %v1294, %v1293
      %v1313 = vpack.c.b16 %v1296, %v1295
      %v1314 = vpack.c.b16 %v1298, %v1297
      %v1316 = vsel %vm772, %v1299, 0
      %v1319 = vsel %vm772, %v1300, 0
      %v1322 = vsel %vm772, %v1301, 0
      %v1325 = vsel %vm772, %v1302, 0
      %v1328 = vsel %vm772, %v1303, 0
      %v1331 = vsel %vm772, %v1304, 0
      %v1334 = vsel %vm772, %v1305, 0
      %v1337 = vsel %vm772, %v1306, 0
      %v1340 = vsel %vm772, %v1307, 0
      %v1343 = vsel %vm772, %v1308, 0
      %v1346 = vsel %vm772, %v1309, 0
      %v1349 = vsel %vm772, %v1310, 0
      %v1352 = vsel %vm772, %v1311, 0
      %v1355 = vsel %vm772, %v1312, 0
      %v1358 = vsel %vm772, %v1313, 0
      %v1361 = vsel %vm772, %v1314, 0
      %v1364 = vsel %vm821, %v1266, 0
      %1366 = vmatpush.bf16.msra.mxu0 0
      %1367 = vmatpush.bf16.msra.mxu0 0
      %1368 = vmatpush.bf16.msra.mxu0 0
      %1369 = vmatpush.bf16.msra.mxu0 0
      %1370 = vmatpush.bf16.msra.mxu0 0
      %1371 = vmatpush.bf16.msra.mxu0 0
      %1372 = vmatpush.bf16.msra.mxu0 0
      %1373 = vmatpush.bf16.msra.mxu0 %v1364
      %1374 = vmatmul.bf16.gmra.mxu0 %v1316
      %v1375 = vpop.f32.mrf.mxu0
      %v1376 = vadd.f32 0.0, %v1375
      %v1377 = vpop.f32.mrf.mxu0
      %v1378 = vadd.f32 0.0, %v1377
      %1379 = vmatmul.bf16.gmra.mxu0 %v1319
      %v1380 = vpop.f32.mrf.mxu0
      %v1381 = vadd.f32 0.0, %v1380
      %v1382 = vpop.f32.mrf.mxu0
      %v1383 = vadd.f32 0.0, %v1382
      %1384 = vmatmul.bf16.gmra.mxu0 %v1322
      %v1385 = vpop.f32.mrf.mxu0
      %v1386 = vadd.f32 0.0, %v1385
      %v1387 = vpop.f32.mrf.mxu0
      %v1388 = vadd.f32 0.0, %v1387
      %1389 = vmatmul.bf16.gmra.mxu0 %v1325
      %v1390 = vpop.f32.mrf.mxu0
      %v1391 = vadd.f32 0.0, %v1390
      %v1392 = vpop.f32.mrf.mxu0
      %v1393 = vadd.f32 0.0, %v1392
      %1394 = vmatmul.bf16.gmra.mxu0 %v1328
      %v1395 = vpop.f32.mrf.mxu0
      %v1396 = vadd.f32 0.0, %v1395
      %v1397 = vpop.f32.mrf.mxu0
      %v1398 = vadd.f32 0.0, %v1397
      %1399 = vmatmul.bf16.gmra.mxu0 %v1331
      %v1400 = vpop.f32.mrf.mxu0
      %v1401 = vadd.f32 0.0, %v1400
      %v1402 = vpop.f32.mrf.mxu0
      %v1403 = vadd.f32 0.0, %v1402
      %1404 = vmatmul.bf16.gmra.mxu0 %v1334
      %v1405 = vpop.f32.mrf.mxu0
      %v1406 = vadd.f32 0.0, %v1405
      %v1407 = vpop.f32.mrf.mxu0
      %v1408 = vadd.f32 0.0, %v1407
      %1409 = vmatmul.bf16.gmra.mxu0 %v1337
      %v1410 = vpop.f32.mrf.mxu0
      %v1411 = vadd.f32 0.0, %v1410
      %v1412 = vpop.f32.mrf.mxu0
      %v1413 = vadd.f32 0.0, %v1412
      %1414 = vmatmul.bf16.gmra.mxu0 %v1340
      %v1415 = vpop.f32.mrf.mxu0
      %v1416 = vadd.f32 0.0, %v1415
      %v1417 = vpop.f32.mrf.mxu0
      %v1418 = vadd.f32 0.0, %v1417
      %1419 = vmatmul.bf16.gmra.mxu0 %v1343
      %v1420 = vpop.f32.mrf.mxu0
      %v1421 = vadd.f32 0.0, %v1420
      %v1422 = vpop.f32.mrf.mxu0
      %v1423 = vadd.f32 0.0, %v1422
      %1424 = vmatmul.bf16.gmra.mxu0 %v1346
      %v1425 = vpop.f32.mrf.mxu0
      %v1426 = vadd.f32 0.0, %v1425
      %v1427 = vpop.f32.mrf.mxu0
      %v1428 = vadd.f32 0.0, %v1427
      %1429 = vmatmul.bf16.gmra.mxu0 %v1349
      %v1430 = vpop.f32.mrf.mxu0
      %v1431 = vadd.f32 0.0, %v1430
      %v1432 = vpop.f32.mrf.mxu0
      %v1433 = vadd.f32 0.0, %v1432
      %1434 = vmatmul.bf16.gmra.mxu0 %v1352
      %v1435 = vpop.f32.mrf.mxu0
      %v1436 = vadd.f32 0.0, %v1435
      %v1437 = vpop.f32.mrf.mxu0
      %v1438 = vadd.f32 0.0, %v1437
      %1439 = vmatmul.bf16.gmra.mxu0 %v1355
      %v1440 = vpop.f32.mrf.mxu0
      %v1441 = vadd.f32 0.0, %v1440
      %v1442 = vpop.f32.mrf.mxu0
      %v1443 = vadd.f32 0.0, %v1442
      %1444 = vmatmul.bf16.gmra.mxu0 %v1358
      %v1445 = vpop.f32.mrf.mxu0
      %v1446 = vadd.f32 0.0, %v1445
      %v1447 = vpop.f32.mrf.mxu0
      %v1448 = vadd.f32 0.0, %v1447
      %1449 = vmatmul.bf16.gmra.mxu0 %v1361
      %v1450 = vpop.f32.mrf.mxu0
      %v1451 = vadd.f32 0.0, %v1450
      %v1452 = vpop.f32.mrf.mxu0
      %v1453 = vadd.f32 0.0, %v1452
      %1454 = vdwg.mxu0
      %v1455 = vadd.f32 %v1055, %v1376
      %v1456 = vadd.f32 %v1057, %v1378
      %v1457 = vadd.f32 %v1060, %v1381
      %v1458 = vadd.f32 %v1062, %v1383
      %v1459 = vadd.f32 %v1065, %v1386
      %v1460 = vadd.f32 %v1067, %v1388
      %v1461 = vadd.f32 %v1070, %v1391
      %v1462 = vadd.f32 %v1072, %v1393
      %v1463 = vadd.f32 %v1075, %v1396
      %v1464 = vadd.f32 %v1077, %v1398
      %v1465 = vadd.f32 %v1080, %v1401
      %v1466 = vadd.f32 %v1082, %v1403
      %v1467 = vadd.f32 %v1085, %v1406
      %v1468 = vadd.f32 %v1087, %v1408
      %v1469 = vadd.f32 %v1090, %v1411
      %v1470 = vadd.f32 %v1092, %v1413
      %v1471 = vadd.f32 %v1095, %v1416
      %v1472 = vadd.f32 %v1097, %v1418
      %v1473 = vadd.f32 %v1100, %v1421
      %v1474 = vadd.f32 %v1102, %v1423
      %v1475 = vadd.f32 %v1105, %v1426
      %v1476 = vadd.f32 %v1107, %v1428
      %v1477 = vadd.f32 %v1110, %v1431
      %v1478 = vadd.f32 %v1112, %v1433
      %v1479 = vadd.f32 %v1115, %v1436
      %v1480 = vadd.f32 %v1117, %v1438
      %v1481 = vadd.f32 %v1120, %v1441
      %v1482 = vadd.f32 %v1122, %v1443
      %v1483 = vadd.f32 %v1125, %v1446
      %v1484 = vadd.f32 %v1127, %v1448
      %v1485 = vadd.f32 %v1130, %v1451
      %v1486 = vadd.f32 %v1132, %v1453
      %s1487 = scalar_lea.vmem %s1, 6
      %v1488 = vld [vmem:[%s1487] sm:$0x3]
      %v1491 = vunpack.c.l.b16 %v328
      %v1492 = vunpack.c.l.b16 %v329
      %v1493 = vpack.c.b16 %v1492, %v1491
      %v1495 = vsel %vm772, %v1493, 0
      %v1498 = vsel %vm821, %v1488, 0
      %1500 = vmatpush.bf16.msra.mxu0 0
      %1501 = vmatpush.bf16.msra.mxu0 0
      %1502 = vmatpush.bf16.msra.mxu0 0
      %1503 = vmatpush.bf16.msra.mxu0 0
      %1504 = vmatpush.bf16.msra.mxu0 0
      %1505 = vmatpush.bf16.msra.mxu0 0
      %1506 = vmatpush.bf16.msra.mxu0 0
      %1507 = vmatpush.bf16.msra.mxu0 %v1498
      %1508 = vmatmul.bf16.gmra.mxu0 %v998
      %v1509 = vpop.f32.mrf.mxu0
      %v1510 = vadd.f32 0.0, %v1509
      %v1511 = vpop.f32.mrf.mxu0
      %v1512 = vadd.f32 0.0, %v1511
      %1513 = vmatmul.bf16.gmra.mxu0 %v1001
      %v1514 = vpop.f32.mrf.mxu0
      %v1515 = vadd.f32 0.0, %v1514
      %v1516 = vpop.f32.mrf.mxu0
      %v1517 = vadd.f32 0.0, %v1516
      %1518 = vmatmul.bf16.gmra.mxu0 %v1004
      %v1519 = vpop.f32.mrf.mxu0
      %v1520 = vadd.f32 0.0, %v1519
      %v1521 = vpop.f32.mrf.mxu0
      %v1522 = vadd.f32 0.0, %v1521
      %1523 = vmatmul.bf16.gmra.mxu0 %v1007
      %v1524 = vpop.f32.mrf.mxu0
      %v1525 = vadd.f32 0.0, %v1524
      %v1526 = vpop.f32.mrf.mxu0
      %v1527 = vadd.f32 0.0, %v1526
      %1528 = vmatmul.bf16.gmra.mxu0 %v1010
      %v1529 = vpop.f32.mrf.mxu0
      %v1530 = vadd.f32 0.0, %v1529
      %v1531 = vpop.f32.mrf.mxu0
      %v1532 = vadd.f32 0.0, %v1531
      %1533 = vmatmul.bf16.gmra.mxu0 %v1013
      %v1534 = vpop.f32.mrf.mxu0
      %v1535 = vadd.f32 0.0, %v1534
      %v1536 = vpop.f32.mrf.mxu0
      %v1537 = vadd.f32 0.0, %v1536
      %1538 = vmatmul.bf16.gmra.mxu0 %v1016
      %v1539 = vpop.f32.mrf.mxu0
      %v1540 = vadd.f32 0.0, %v1539
      %v1541 = vpop.f32.mrf.mxu0
      %v1542 = vadd.f32 0.0, %v1541
      %1543 = vmatmul.bf16.gmra.mxu0 %v1019
      %v1544 = vpop.f32.mrf.mxu0
      %v1545 = vadd.f32 0.0, %v1544
      %v1546 = vpop.f32.mrf.mxu0
      %v1547 = vadd.f32 0.0, %v1546
      %1548 = vmatmul.bf16.gmra.mxu0 %v1022
      %v1549 = vpop.f32.mrf.mxu0
      %v1550 = vadd.f32 0.0, %v1549
      %v1551 = vpop.f32.mrf.mxu0
      %v1552 = vadd.f32 0.0, %v1551
      %1553 = vmatmul.bf16.gmra.mxu0 %v1025
      %v1554 = vpop.f32.mrf.mxu0
      %v1555 = vadd.f32 0.0, %v1554
      %v1556 = vpop.f32.mrf.mxu0
      %v1557 = vadd.f32 0.0, %v1556
      %1558 = vmatmul.bf16.gmra.mxu0 %v1028
      %v1559 = vpop.f32.mrf.mxu0
      %v1560 = vadd.f32 0.0, %v1559
      %v1561 = vpop.f32.mrf.mxu0
      %v1562 = vadd.f32 0.0, %v1561
      %1563 = vmatmul.bf16.gmra.mxu0 %v1031
      %v1564 = vpop.f32.mrf.mxu0
      %v1565 = vadd.f32 0.0, %v1564
      %v1566 = vpop.f32.mrf.mxu0
      %v1567 = vadd.f32 0.0, %v1566
      %1568 = vmatmul.bf16.gmra.mxu0 %v1034
      %v1569 = vpop.f32.mrf.mxu0
      %v1570 = vadd.f32 0.0, %v1569
      %v1571 = vpop.f32.mrf.mxu0
      %v1572 = vadd.f32 0.0, %v1571
      %1573 = vmatmul.bf16.gmra.mxu0 %v1037
      %v1574 = vpop.f32.mrf.mxu0
      %v1575 = vadd.f32 0.0, %v1574
      %v1576 = vpop.f32.mrf.mxu0
      %v1577 = vadd.f32 0.0, %v1576
      %1578 = vmatmul.bf16.gmra.mxu0 %v1040
      %v1579 = vpop.f32.mrf.mxu0
      %v1580 = vadd.f32 0.0, %v1579
      %v1581 = vpop.f32.mrf.mxu0
      %v1582 = vadd.f32 0.0, %v1581
      %1583 = vmatmul.bf16.gmra.mxu0 %v1495
      %v1584 = vpop.f32.mrf.mxu0
      %v1585 = vadd.f32 0.0, %v1584
      %v1586 = vpop.f32.mrf.mxu0
      %v1587 = vadd.f32 0.0, %v1586
      %1588 = vdwg.mxu0
      %v1589 = vadd.f32 %v1455, %v1510
      %v1590 = vadd.f32 %v1456, %v1512
      %v1591 = vadd.f32 %v1457, %v1515
      %v1592 = vadd.f32 %v1458, %v1517
      %v1593 = vadd.f32 %v1459, %v1520
      %v1594 = vadd.f32 %v1460, %v1522
      %v1595 = vadd.f32 %v1461, %v1525
      %v1596 = vadd.f32 %v1462, %v1527
      %v1597 = vadd.f32 %v1463, %v1530
      %v1598 = vadd.f32 %v1464, %v1532
      %v1599 = vadd.f32 %v1465, %v1535
      %v1600 = vadd.f32 %v1466, %v1537
      %v1601 = vadd.f32 %v1467, %v1540
      %v1602 = vadd.f32 %v1468, %v1542
      %v1603 = vadd.f32 %v1469, %v1545
      %v1604 = vadd.f32 %v1470, %v1547
      %v1605 = vadd.f32 %v1471, %v1550
      %v1606 = vadd.f32 %v1472, %v1552
      %v1607 = vadd.f32 %v1473, %v1555
      %v1608 = vadd.f32 %v1474, %v1557
      %v1609 = vadd.f32 %v1475, %v1560
      %v1610 = vadd.f32 %v1476, %v1562
      %v1611 = vadd.f32 %v1477, %v1565
      %v1612 = vadd.f32 %v1478, %v1567
      %v1613 = vadd.f32 %v1479, %v1570
      %v1614 = vadd.f32 %v1480, %v1572
      %v1615 = vadd.f32 %v1481, %v1575
      %v1616 = vadd.f32 %v1482, %v1577
      %v1617 = vadd.f32 %v1483, %v1580
      %v1618 = vadd.f32 %v1484, %v1582
      %v1619 = vadd.f32 %v1485, %v1585
      %v1620 = vadd.f32 %v1486, %v1587
      %v1622 = vshrl.u32 %v328, 16
      %v1624 = vrot.slane %v1622, 4
      %v1625 = vshll.u32 %v328, 16
      %v1627 = vrot.slane %v1625, 5
      %v1628 = vor.u32 %v1624, %v1627
      %v1629 = vrot.slane %v1628, 4
      %v1631 = vshll.u32 %v329, 16
      %v1633 = vrot.slane %v1631, 5
      %v1634 = vsel %vm337, %v1629, %v1633
      %v1635 = vshrl.u32 %v329, 16
      %v1637 = vrot.slane %v1635, 4
      %v1638 = vor.u32 %v1637, %v1633
      %v1639 = vrot.slane %v1638, 4
      %v1641 = vshll.u32 %v330, 16
      %v1643 = vrot.slane %v1641, 5
      %v1644 = vsel %vm337, %v1639, %v1643
      %s1645 = scalar_lea.vmem %s1, 8
      %v1646 = vld [vmem:[%s1645] sm:$0x3]
      %v1647 = vunpack.c.l.b16 %v1634
      %v1648 = vunpack.c.l.b16 %v1644
      %v1649 = vpack.c.b16 %v1648, %v1647
      %v1651 = vsel %vm772, %v1649, 0
      %v1654 = vsel %vm821, %v1646, 0
      %1656 = vmatpush.bf16.msra.mxu0 0
      %1657 = vmatpush.bf16.msra.mxu0 0
      %1658 = vmatpush.bf16.msra.mxu0 0
      %1659 = vmatpush.bf16.msra.mxu0 0
      %1660 = vmatpush.bf16.msra.mxu0 0
      %1661 = vmatpush.bf16.msra.mxu0 0
      %1662 = vmatpush.bf16.msra.mxu0 0
      %1663 = vmatpush.bf16.msra.mxu0 %v1654
      %1664 = vmatmul.bf16.gmra.mxu0 %v777
      %v1665 = vpop.f32.mrf.mxu0
      %v1666 = vadd.f32 0.0, %v1665
      %v1667 = vpop.f32.mrf.mxu0
      %v1668 = vadd.f32 0.0, %v1667
      %1669 = vmatmul.bf16.gmra.mxu0 %v780
      %v1670 = vpop.f32.mrf.mxu0
      %v1671 = vadd.f32 0.0, %v1670
      %v1672 = vpop.f32.mrf.mxu0
      %v1673 = vadd.f32 0.0, %v1672
      %1674 = vmatmul.bf16.gmra.mxu0 %v783
      %v1675 = vpop.f32.mrf.mxu0
      %v1676 = vadd.f32 0.0, %v1675
      %v1677 = vpop.f32.mrf.mxu0
      %v1678 = vadd.f32 0.0, %v1677
      %1679 = vmatmul.bf16.gmra.mxu0 %v786
      %v1680 = vpop.f32.mrf.mxu0
      %v1681 = vadd.f32 0.0, %v1680
      %v1682 = vpop.f32.mrf.mxu0
      %v1683 = vadd.f32 0.0, %v1682
      %1684 = vmatmul.bf16.gmra.mxu0 %v789
      %v1685 = vpop.f32.mrf.mxu0
      %v1686 = vadd.f32 0.0, %v1685
      %v1687 = vpop.f32.mrf.mxu0
      %v1688 = vadd.f32 0.0, %v1687
      %1689 = vmatmul.bf16.gmra.mxu0 %v792
      %v1690 = vpop.f32.mrf.mxu0
      %v1691 = vadd.f32 0.0, %v1690
      %v1692 = vpop.f32.mrf.mxu0
      %v1693 = vadd.f32 0.0, %v1692
      %1694 = vmatmul.bf16.gmra.mxu0 %v795
      %v1695 = vpop.f32.mrf.mxu0
      %v1696 = vadd.f32 0.0, %v1695
      %v1697 = vpop.f32.mrf.mxu0
      %v1698 = vadd.f32 0.0, %v1697
      %1699 = vmatmul.bf16.gmra.mxu0 %v798
      %v1700 = vpop.f32.mrf.mxu0
      %v1701 = vadd.f32 0.0, %v1700
      %v1702 = vpop.f32.mrf.mxu0
      %v1703 = vadd.f32 0.0, %v1702
      %1704 = vmatmul.bf16.gmra.mxu0 %v801
      %v1705 = vpop.f32.mrf.mxu0
      %v1706 = vadd.f32 0.0, %v1705
      %v1707 = vpop.f32.mrf.mxu0
      %v1708 = vadd.f32 0.0, %v1707
      %1709 = vmatmul.bf16.gmra.mxu0 %v804
      %v1710 = vpop.f32.mrf.mxu0
      %v1711 = vadd.f32 0.0, %v1710
      %v1712 = vpop.f32.mrf.mxu0
      %v1713 = vadd.f32 0.0, %v1712
      %1714 = vmatmul.bf16.gmra.mxu0 %v807
      %v1715 = vpop.f32.mrf.mxu0
      %v1716 = vadd.f32 0.0, %v1715
      %v1717 = vpop.f32.mrf.mxu0
      %v1718 = vadd.f32 0.0, %v1717
      %1719 = vmatmul.bf16.gmra.mxu0 %v810
      %v1720 = vpop.f32.mrf.mxu0
      %v1721 = vadd.f32 0.0, %v1720
      %v1722 = vpop.f32.mrf.mxu0
      %v1723 = vadd.f32 0.0, %v1722
      %1724 = vmatmul.bf16.gmra.mxu0 %v813
      %v1725 = vpop.f32.mrf.mxu0
      %v1726 = vadd.f32 0.0, %v1725
      %v1727 = vpop.f32.mrf.mxu0
      %v1728 = vadd.f32 0.0, %v1727
      %1729 = vmatmul.bf16.gmra.mxu0 %v816
      %v1730 = vpop.f32.mrf.mxu0
      %v1731 = vadd.f32 0.0, %v1730
      %v1732 = vpop.f32.mrf.mxu0
      %v1733 = vadd.f32 0.0, %v1732
      %1734 = vmatmul.bf16.gmra.mxu0 %v819
      %v1735 = vpop.f32.mrf.mxu0
      %v1736 = vadd.f32 0.0, %v1735
      %v1737 = vpop.f32.mrf.mxu0
      %v1738 = vadd.f32 0.0, %v1737
      %1739 = vmatmul.bf16.gmra.mxu0 %v1651
      %v1740 = vpop.f32.mrf.mxu0
      %v1741 = vadd.f32 0.0, %v1740
      %v1742 = vpop.f32.mrf.mxu0
      %v1743 = vadd.f32 0.0, %v1742
      %1744 = vdwg.mxu0
      %v1745 = vadd.f32 %v1589, %v1666
      %v1746 = vadd.f32 %v1590, %v1668
      %v1747 = vadd.f32 %v1591, %v1671
      %v1748 = vadd.f32 %v1592, %v1673
      %v1749 = vadd.f32 %v1593, %v1676
      %v1750 = vadd.f32 %v1594, %v1678
      %v1751 = vadd.f32 %v1595, %v1681
      %v1752 = vadd.f32 %v1596, %v1683
      %v1753 = vadd.f32 %v1597, %v1686
      %v1754 = vadd.f32 %v1598, %v1688
      %v1755 = vadd.f32 %v1599, %v1691
      %v1756 = vadd.f32 %v1600, %v1693
      %v1757 = vadd.f32 %v1601, %v1696
      %v1758 = vadd.f32 %v1602, %v1698
      %v1759 = vadd.f32 %v1603, %v1701
      %v1760 = vadd.f32 %v1604, %v1703
      %v1761 = vadd.f32 %v1605, %v1706
      %v1762 = vadd.f32 %v1606, %v1708
      %v1763 = vadd.f32 %v1607, %v1711
      %v1764 = vadd.f32 %v1608, %v1713
      %v1765 = vadd.f32 %v1609, %v1716
      %v1766 = vadd.f32 %v1610, %v1718
      %v1767 = vadd.f32 %v1611, %v1721
      %v1768 = vadd.f32 %v1612, %v1723
      %v1769 = vadd.f32 %v1613, %v1726
      %v1770 = vadd.f32 %v1614, %v1728
      %v1771 = vadd.f32 %v1615, %v1731
      %v1772 = vadd.f32 %v1616, %v1733
      %v1773 = vadd.f32 %v1617, %v1736
      %v1774 = vadd.f32 %v1618, %v1738
      %v1775 = vadd.f32 %v1619, %v1741
      %v1776 = vadd.f32 %v1620, %v1743
      %v1778 = vrot.slane %v328, 5
      %v1779 = vrot.slane %v1778, 4
      %v1780 = vrot.slane %v329, 5
      %v1781 = vsel %vm1152, %v1779, %v1780
      %v1782 = vrot.slane %v1780, 4
      %v1783 = vrot.slane %v330, 5
      %v1784 = vsel %vm1152, %v1782, %v1783
      %s1785 = scalar_lea.vmem %s1, 10
      %v1786 = vld [vmem:[%s1785] sm:$0x3]
      %v1787 = vunpack.c.l.b16 %v1781
      %v1788 = vunpack.c.l.b16 %v1784
      %v1789 = vpack.c.b16 %v1788, %v1787
      %v1791 = vsel %vm772, %v1789, 0
      %v1794 = vsel %vm821, %v1786, 0
      %1796 = vmatpush.bf16.msra.mxu0 0
      %1797 = vmatpush.bf16.msra.mxu0 0
      %1798 = vmatpush.bf16.msra.mxu0 0
      %1799 = vmatpush.bf16.msra.mxu0 0
      %1800 = vmatpush.bf16.msra.mxu0 0
      %1801 = vmatpush.bf16.msra.mxu0 0
      %1802 = vmatpush.bf16.msra.mxu0 0
      %1803 = vmatpush.bf16.msra.mxu0 %v1794
      %1804 = vmatmul.bf16.gmra.mxu0 %v1319
      %v1805 = vpop.f32.mrf.mxu0
      %v1806 = vadd.f32 0.0, %v1805
      %v1807 = vpop.f32.mrf.mxu0
      %v1808 = vadd.f32 0.0, %v1807
      %1809 = vmatmul.bf16.gmra.mxu0 %v1322
      %v1810 = vpop.f32.mrf.mxu0
      %v1811 = vadd.f32 0.0, %v1810
      %v1812 = vpop.f32.mrf.mxu0
      %v1813 = vadd.f32 0.0, %v1812
      %1814 = vmatmul.bf16.gmra.mxu0 %v1325
      %v1815 = vpop.f32.mrf.mxu0
      %v1816 = vadd.f32 0.0, %v1815
      %v1817 = vpop.f32.mrf.mxu0
      %v1818 = vadd.f32 0.0, %v1817
      %1819 = vmatmul.bf16.gmra.mxu0 %v1328
      %v1820 = vpop.f32.mrf.mxu0
      %v1821 = vadd.f32 0.0, %v1820
      %v1822 = vpop.f32.mrf.mxu0
      %v1823 = vadd.f32 0.0, %v1822
      %1824 = vmatmul.bf16.gmra.mxu0 %v1331
      %v1825 = vpop.f32.mrf.mxu0
      %v1826 = vadd.f32 0.0, %v1825
      %v1827 = vpop.f32.mrf.mxu0
      %v1828 = vadd.f32 0.0, %v1827
      %1829 = vmatmul.bf16.gmra.mxu0 %v1334
      %v1830 = vpop.f32.mrf.mxu0
      %v1831 = vadd.f32 0.0, %v1830
      %v1832 = vpop.f32.mrf.mxu0
      %v1833 = vadd.f32 0.0, %v1832
      %1834 = vmatmul.bf16.gmra.mxu0 %v1337
      %v1835 = vpop.f32.mrf.mxu0
      %v1836 = vadd.f32 0.0, %v1835
      %v1837 = vpop.f32.mrf.mxu0
      %v1838 = vadd.f32 0.0, %v1837
      %1839 = vmatmul.bf16.gmra.mxu0 %v1340
      %v1840 = vpop.f32.mrf.mxu0
      %v1841 = vadd.f32 0.0, %v1840
      %v1842 = vpop.f32.mrf.mxu0
      %v1843 = vadd.f32 0.0, %v1842
      %1844 = vmatmul.bf16.gmra.mxu0 %v1343
      %v1845 = vpop.f32.mrf.mxu0
      %v1846 = vadd.f32 0.0, %v1845
      %v1847 = vpop.f32.mrf.mxu0
      %v1848 = vadd.f32 0.0, %v1847
      %1849 = vmatmul.bf16.gmra.mxu0 %v1346
      %v1850 = vpop.f32.mrf.mxu0
      %v1851 = vadd.f32 0.0, %v1850
      %v1852 = vpop.f32.mrf.mxu0
      %v1853 = vadd.f32 0.0, %v1852
      %1854 = vmatmul.bf16.gmra.mxu0 %v1349
      %v1855 = vpop.f32.mrf.mxu0
      %v1856 = vadd.f32 0.0, %v1855
      %v1857 = vpop.f32.mrf.mxu0
      %v1858 = vadd.f32 0.0, %v1857
      %1859 = vmatmul.bf16.gmra.mxu0 %v1352
      %v1860 = vpop.f32.mrf.mxu0
      %v1861 = vadd.f32 0.0, %v1860
      %v1862 = vpop.f32.mrf.mxu0
      %v1863 = vadd.f32 0.0, %v1862
      %1864 = vmatmul.bf16.gmra.mxu0 %v1355
      %v1865 = vpop.f32.mrf.mxu0
      %v1866 = vadd.f32 0.0, %v1865
      %v1867 = vpop.f32.mrf.mxu0
      %v1868 = vadd.f32 0.0, %v1867
      %1869 = vmatmul.bf16.gmra.mxu0 %v1358
      %v1870 = vpop.f32.mrf.mxu0
      %v1871 = vadd.f32 0.0, %v1870
      %v1872 = vpop.f32.mrf.mxu0
      %v1873 = vadd.f32 0.0, %v1872
      %1874 = vmatmul.bf16.gmra.mxu0 %v1361
      %v1875 = vpop.f32.mrf.mxu0
      %v1876 = vadd.f32 0.0, %v1875
      %v1877 = vpop.f32.mrf.mxu0
      %v1878 = vadd.f32 0.0, %v1877
      %1879 = vmatmul.bf16.gmra.mxu0 %v1791
      %v1880 = vpop.f32.mrf.mxu0
      %v1881 = vadd.f32 0.0, %v1880
      %v1882 = vpop.f32.mrf.mxu0
      %v1883 = vadd.f32 0.0, %v1882
      %1884 = vdwg.mxu0
      %v1885 = vadd.f32 %v1745, %v1806
      %v1886 = vadd.f32 %v1746, %v1808
      %v1887 = vadd.f32 %v1747, %v1811
      %v1888 = vadd.f32 %v1748, %v1813
      %v1889 = vadd.f32 %v1749, %v1816
      %v1890 = vadd.f32 %v1750, %v1818
      %v1891 = vadd.f32 %v1751, %v1821
      %v1892 = vadd.f32 %v1752, %v1823
      %v1893 = vadd.f32 %v1753, %v1826
      %v1894 = vadd.f32 %v1754, %v1828
      %v1895 = vadd.f32 %v1755, %v1831
      %v1896 = vadd.f32 %v1756, %v1833
      %v1897 = vadd.f32 %v1757, %v1836
      %v1898 = vadd.f32 %v1758, %v1838
      %v1899 = vadd.f32 %v1759, %v1841
      %v1900 = vadd.f32 %v1760, %v1843
      %v1901 = vadd.f32 %v1761, %v1846
      %v1902 = vadd.f32 %v1762, %v1848
      %v1903 = vadd.f32 %v1763, %v1851
      %v1904 = vadd.f32 %v1764, %v1853
      %v1905 = vadd.f32 %v1765, %v1856
      %v1906 = vadd.f32 %v1766, %v1858
      %v1907 = vadd.f32 %v1767, %v1861
      %v1908 = vadd.f32 %v1768, %v1863
      %v1909 = vadd.f32 %v1769, %v1866
      %v1910 = vadd.f32 %v1770, %v1868
      %v1911 = vadd.f32 %v1771, %v1871
      %v1912 = vadd.f32 %v1772, %v1873
      %v1913 = vadd.f32 %v1773, %v1876
      %v1914 = vadd.f32 %v1774, %v1878
      %v1915 = vadd.f32 %v1775, %v1881
      %v1916 = vadd.f32 %v1776, %v1883
      %s1917 = scalar_lea.vmem %s1, 12
      %v1918 = vld [vmem:[%s1917] sm:$0x3]
      %v1921 = vunpack.c.l.b16 %v331
      %v1922 = vunpack.c.l.b16 %v332
      %v1923 = vpack.c.b16 %v1922, %v1921
      %v1925 = vsel %vm772, %v1923, 0
      %v1928 = vsel %vm821, %v1918, 0
      %1930 = vmatpush.bf16.msra.mxu0 0
      %1931 = vmatpush.bf16.msra.mxu0 0
      %1932 = vmatpush.bf16.msra.mxu0 0
      %1933 = vmatpush.bf16.msra.mxu0 0
      %1934 = vmatpush.bf16.msra.mxu0 0
      %1935 = vmatpush.bf16.msra.mxu0 0
      %1936 = vmatpush.bf16.msra.mxu0 0
      %1937 = vmatpush.bf16.msra.mxu0 %v1928
      %1938 = vmatmul.bf16.gmra.mxu0 %v1001
      %v1939 = vpop.f32.mrf.mxu0
      %v1940 = vadd.f32 0.0, %v1939
      %v1941 = vpop.f32.mrf.mxu0
      %v1942 = vadd.f32 0.0, %v1941
      %1943 = vmatmul.bf16.gmra.mxu0 %v1004
      %v1944 = vpop.f32.mrf.mxu0
      %v1945 = vadd.f32 0.0, %v1944
      %v1946 = vpop.f32.mrf.mxu0
      %v1947 = vadd.f32 0.0, %v1946
      %1948 = vmatmul.bf16.gmra.mxu0 %v1007
      %v1949 = vpop.f32.mrf.mxu0
      %v1950 = vadd.f32 0.0, %v1949
      %v1951 = vpop.f32.mrf.mxu0
      %v1952 = vadd.f32 0.0, %v1951
      %1953 = vmatmul.bf16.gmra.mxu0 %v1010
      %v1954 = vpop.f32.mrf.mxu0
      %v1955 = vadd.f32 0.0, %v1954
      %v1956 = vpop.f32.mrf.mxu0
      %v1957 = vadd.f32 0.0, %v1956
      %1958 = vmatmul.bf16.gmra.mxu0 %v1013
      %v1959 = vpop.f32.mrf.mxu0
      %v1960 = vadd.f32 0.0, %v1959
      %v1961 = vpop.f32.mrf.mxu0
      %v1962 = vadd.f32 0.0, %v1961
      %1963 = vmatmul.bf16.gmra.mxu0 %v1016
      %v1964 = vpop.f32.mrf.mxu0
      %v1965 = vadd.f32 0.0, %v1964
      %v1966 = vpop.f32.mrf.mxu0
      %v1967 = vadd.f32 0.0, %v1966
      %1968 = vmatmul.bf16.gmra.mxu0 %v1019
      %v1969 = vpop.f32.mrf.mxu0
      %v1970 = vadd.f32 0.0, %v1969
      %v1971 = vpop.f32.mrf.mxu0
      %v1972 = vadd.f32 0.0, %v1971
      %1973 = vmatmul.bf16.gmra.mxu0 %v1022
      %v1974 = vpop.f32.mrf.mxu0
      %v1975 = vadd.f32 0.0, %v1974
      %v1976 = vpop.f32.mrf.mxu0
      %v1977 = vadd.f32 0.0, %v1976
      %1978 = vmatmul.bf16.gmra.mxu0 %v1025
      %v1979 = vpop.f32.mrf.mxu0
      %v1980 = vadd.f32 0.0, %v1979
      %v1981 = vpop.f32.mrf.mxu0
      %v1982 = vadd.f32 0.0, %v1981
      %1983 = vmatmul.bf16.gmra.mxu0 %v1028
      %v1984 = vpop.f32.mrf.mxu0
      %v1985 = vadd.f32 0.0, %v1984
      %v1986 = vpop.f32.mrf.mxu0
      %v1987 = vadd.f32 0.0, %v1986
      %1988 = vmatmul.bf16.gmra.mxu0 %v1031
      %v1989 = vpop.f32.mrf.mxu0
      %v1990 = vadd.f32 0.0, %v1989
      %v1991 = vpop.f32.mrf.mxu0
      %v1992 = vadd.f32 0.0, %v1991
      %1993 = vmatmul.bf16.gmra.mxu0 %v1034
      %v1994 = vpop.f32.mrf.mxu0
      %v1995 = vadd.f32 0.0, %v1994
      %v1996 = vpop.f32.mrf.mxu0
      %v1997 = vadd.f32 0.0, %v1996
      %1998 = vmatmul.bf16.gmra.mxu0 %v1037
      %v1999 = vpop.f32.mrf.mxu0
      %v2000 = vadd.f32 0.0, %v1999
      %v2001 = vpop.f32.mrf.mxu0
      %v2002 = vadd.f32 0.0, %v2001
      %2003 = vmatmul.bf16.gmra.mxu0 %v1040
      %v2004 = vpop.f32.mrf.mxu0
      %v2005 = vadd.f32 0.0, %v2004
      %v2006 = vpop.f32.mrf.mxu0
      %v2007 = vadd.f32 0.0, %v2006
      %2008 = vmatmul.bf16.gmra.mxu0 %v1495
      %v2009 = vpop.f32.mrf.mxu0
      %v2010 = vadd.f32 0.0, %v2009
      %v2011 = vpop.f32.mrf.mxu0
      %v2012 = vadd.f32 0.0, %v2011
      %2013 = vmatmul.bf16.gmra.mxu0 %v1925
      %v2014 = vpop.f32.mrf.mxu0
      %v2015 = vadd.f32 0.0, %v2014
      %v2016 = vpop.f32.mrf.mxu0
      %v2017 = vadd.f32 0.0, %v2016
      %2018 = vdwg.mxu0
      %v2019 = vadd.f32 %v1885, %v1940
      %v2020 = vadd.f32 %v1886, %v1942
      %v2021 = vadd.f32 %v1887, %v1945
      %v2022 = vadd.f32 %v1888, %v1947
      %v2023 = vadd.f32 %v1889, %v1950
      %v2024 = vadd.f32 %v1890, %v1952
      %v2025 = vadd.f32 %v1891, %v1955
      %v2026 = vadd.f32 %v1892, %v1957
      %v2027 = vadd.f32 %v1893, %v1960
      %v2028 = vadd.f32 %v1894, %v1962
      %v2029 = vadd.f32 %v1895, %v1965
      %v2030 = vadd.f32 %v1896, %v1967
      %v2031 = vadd.f32 %v1897, %v1970
      %v2032 = vadd.f32 %v1898, %v1972
      %v2033 = vadd.f32 %v1899, %v1975
      %v2034 = vadd.f32 %v1900, %v1977
      %v2035 = vadd.f32 %v1901, %v1980
      %v2036 = vadd.f32 %v1902, %v1982
      %v2037 = vadd.f32 %v1903, %v1985
      %v2038 = vadd.f32 %v1904, %v1987
      %v2039 = vadd.f32 %v1905, %v1990
      %v2040 = vadd.f32 %v1906, %v1992
      %v2041 = vadd.f32 %v1907, %v1995
      %v2042 = vadd.f32 %v1908, %v1997
      %v2043 = vadd.f32 %v1909, %v2000
      %v2044 = vadd.f32 %v1910, %v2002
      %v2045 = vadd.f32 %v1911, %v2005
      %v2046 = vadd.f32 %v1912, %v2007
      %v2047 = vadd.f32 %v1913, %v2010
      %v2048 = vadd.f32 %v1914, %v2012
      %v2049 = vadd.f32 %v1915, %v2015
      %v2050 = vadd.f32 %v1916, %v2017
      %v2052 = vshrl.u32 %v331, 16
      %v2054 = vrot.slane %v2052, 4
      %v2055 = vshll.u32 %v331, 16
      %v2057 = vrot.slane %v2055, 5
      %v2058 = vor.u32 %v2054, %v2057
      %v2059 = vrot.slane %v2058, 4
      %v2061 = vshll.u32 %v332, 16
      %v2063 = vrot.slane %v2061, 5
      %v2064 = vsel %vm337, %v2059, %v2063
      %v2065 = vshrl.u32 %v332, 16
      %v2067 = vrot.slane %v2065, 4
      %v2068 = vor.u32 %v2067, %v2063
      %v2069 = vrot.slane %v2068, 4
      %v2071 = vshll.u32 %v333, 16
      %v2073 = vrot.slane %v2071, 5
      %v2074 = vsel %vm337, %v2069, %v2073
      %s2075 = scalar_lea.vmem %s1, 14
      %v2076 = vld [vmem:[%s2075] sm:$0x3]
      %v2077 = vunpack.c.l.b16 %v2064
      %v2078 = vunpack.c.l.b16 %v2074
      %v2079 = vpack.c.b16 %v2078, %v2077
      %v2081 = vsel %vm772, %v2079, 0
      %v2084 = vsel %vm821, %v2076, 0
      %2086 = vmatpush.bf16.msra.mxu0 0
      %2087 = vmatpush.bf16.msra.mxu0 0
      %2088 = vmatpush.bf16.msra.mxu0 0
      %2089 = vmatpush.bf16.msra.mxu0 0
      %2090 = vmatpush.bf16.msra.mxu0 0
      %2091 = vmatpush.bf16.msra.mxu0 0
      %2092 = vmatpush.bf16.msra.mxu0 0
      %2093 = vmatpush.bf16.msra.mxu0 %v2084
      %2094 = vmatmul.bf16.gmra.mxu0 %v780
      %v2095 = vpop.f32.mrf.mxu0
      %v2096 = vadd.f32 0.0, %v2095
      %v2097 = vpop.f32.mrf.mxu0
      %v2098 = vadd.f32 0.0, %v2097
      %2099 = vmatmul.bf16.gmra.mxu0 %v783
      %v2100 = vpop.f32.mrf.mxu0
      %v2101 = vadd.f32 0.0, %v2100
      %v2102 = vpop.f32.mrf.mxu0
      %v2103 = vadd.f32 0.0, %v2102
      %2104 = vmatmul.bf16.gmra.mxu0 %v786
      %v2105 = vpop.f32.mrf.mxu0
      %v2106 = vadd.f32 0.0, %v2105
      %v2107 = vpop.f32.mrf.mxu0
      %v2108 = vadd.f32 0.0, %v2107
      %2109 = vmatmul.bf16.gmra.mxu0 %v789
      %v2110 = vpop.f32.mrf.mxu0
      %v2111 = vadd.f32 0.0, %v2110
      %v2112 = vpop.f32.mrf.mxu0
      %v2113 = vadd.f32 0.0, %v2112
      %2114 = vmatmul.bf16.gmra.mxu0 %v792
      %v2115 = vpop.f32.mrf.mxu0
      %v2116 = vadd.f32 0.0, %v2115
      %v2117 = vpop.f32.mrf.mxu0
      %v2118 = vadd.f32 0.0, %v2117
      %2119 = vmatmul.bf16.gmra.mxu0 %v795
      %v2120 = vpop.f32.mrf.mxu0
      %v2121 = vadd.f32 0.0, %v2120
      %v2122 = vpop.f32.mrf.mxu0
      %v2123 = vadd.f32 0.0, %v2122
      %2124 = vmatmul.bf16.gmra.mxu0 %v798
      %v2125 = vpop.f32.mrf.mxu0
      %v2126 = vadd.f32 0.0, %v2125
      %v2127 = vpop.f32.mrf.mxu0
      %v2128 = vadd.f32 0.0, %v2127
      %2129 = vmatmul.bf16.gmra.mxu0 %v801
      %v2130 = vpop.f32.mrf.mxu0
      %v2131 = vadd.f32 0.0, %v2130
      %v2132 = vpop.f32.mrf.mxu0
      %v2133 = vadd.f32 0.0, %v2132
      %2134 = vmatmul.bf16.gmra.mxu0 %v804
      %v2135 = vpop.f32.mrf.mxu0
      %v2136 = vadd.f32 0.0, %v2135
      %v2137 = vpop.f32.mrf.mxu0
      %v2138 = vadd.f32 0.0, %v2137
      %2139 = vmatmul.bf16.gmra.mxu0 %v807
      %v2140 = vpop.f32.mrf.mxu0
      %v2141 = vadd.f32 0.0, %v2140
      %v2142 = vpop.f32.mrf.mxu0
      %v2143 = vadd.f32 0.0, %v2142
      %2144 = vmatmul.bf16.gmra.mxu0 %v810
      %v2145 = vpop.f32.mrf.mxu0
      %v2146 = vadd.f32 0.0, %v2145
      %v2147 = vpop.f32.mrf.mxu0
      %v2148 = vadd.f32 0.0, %v2147
      %2149 = vmatmul.bf16.gmra.mxu0 %v813
      %v2150 = vpop.f32.mrf.mxu0
      %v2151 = vadd.f32 0.0, %v2150
      %v2152 = vpop.f32.mrf.mxu0
      %v2153 = vadd.f32 0.0, %v2152
      %2154 = vmatmul.bf16.gmra.mxu0 %v816
      %v2155 = vpop.f32.mrf.mxu0
      %v2156 = vadd.f32 0.0, %v2155
      %v2157 = vpop.f32.mrf.mxu0
      %v2158 = vadd.f32 0.0, %v2157
      %2159 = vmatmul.bf16.gmra.mxu0 %v819
      %v2160 = vpop.f32.mrf.mxu0
      %v2161 = vadd.f32 0.0, %v2160
      %v2162 = vpop.f32.mrf.mxu0
      %v2163 = vadd.f32 0.0, %v2162
      %2164 = vmatmul.bf16.gmra.mxu0 %v1651
      %v2165 = vpop.f32.mrf.mxu0
      %v2166 = vadd.f32 0.0, %v2165
      %v2167 = vpop.f32.mrf.mxu0
      %v2168 = vadd.f32 0.0, %v2167
      %2169 = vmatmul.bf16.gmra.mxu0 %v2081
      %v2170 = vpop.f32.mrf.mxu0
      %v2171 = vadd.f32 0.0, %v2170
      %v2172 = vpop.f32.mrf.mxu0
      %v2173 = vadd.f32 0.0, %v2172
      %2174 = vdwg.mxu0
      %v2175 = vadd.f32 %v2019, %v2096
      %v2176 = vadd.f32 %v2020, %v2098
      %v2177 = vadd.f32 %v2021, %v2101
      %v2178 = vadd.f32 %v2022, %v2103
      %v2179 = vadd.f32 %v2023, %v2106
      %v2180 = vadd.f32 %v2024, %v2108
      %v2181 = vadd.f32 %v2025, %v2111
      %v2182 = vadd.f32 %v2026, %v2113
      %v2183 = vadd.f32 %v2027, %v2116
      %v2184 = vadd.f32 %v2028, %v2118
      %v2185 = vadd.f32 %v2029, %v2121
      %v2186 = vadd.f32 %v2030, %v2123
      %v2187 = vadd.f32 %v2031, %v2126
      %v2188 = vadd.f32 %v2032, %v2128
      %v2189 = vadd.f32 %v2033, %v2131
      %v2190 = vadd.f32 %v2034, %v2133
      %v2191 = vadd.f32 %v2035, %v2136
      %v2192 = vadd.f32 %v2036, %v2138
      %v2193 = vadd.f32 %v2037, %v2141
      %v2194 = vadd.f32 %v2038, %v2143
      %v2195 = vadd.f32 %v2039, %v2146
      %v2196 = vadd.f32 %v2040, %v2148
      %v2197 = vadd.f32 %v2041, %v2151
      %v2198 = vadd.f32 %v2042, %v2153
      %v2199 = vadd.f32 %v2043, %v2156
      %v2200 = vadd.f32 %v2044, %v2158
      %v2201 = vadd.f32 %v2045, %v2161
      %v2202 = vadd.f32 %v2046, %v2163
      %v2203 = vadd.f32 %v2047, %v2166
      %v2204 = vadd.f32 %v2048, %v2168
      %v2205 = vadd.f32 %v2049, %v2171
      %v2206 = vadd.f32 %v2050, %v2173
      %v2208 = vrot.slane %v331, 5
      %v2209 = vrot.slane %v2208, 4
      %v2210 = vrot.slane %v332, 5
      %v2211 = vsel %vm1152, %v2209, %v2210
      %v2212 = vrot.slane %v2210, 4
      %v2213 = vrot.slane %v333, 5
      %v2214 = vsel %vm1152, %v2212, %v2213
      %s2215 = scalar_lea.vmem %s1, 16
      %v2216 = vld [vmem:[%s2215] sm:$0x3]
      %v2217 = vunpack.c.l.b16 %v2211
      %v2218 = vunpack.c.l.b16 %v2214
      %v2219 = vpack.c.b16 %v2218, %v2217
      %v2221 = vsel %vm772, %v2219, 0
      %v2224 = vsel %vm821, %v2216, 0
      %2226 = vmatpush.bf16.msra.mxu0 0
      %2227 = vmatpush.bf16.msra.mxu0 0
      %2228 = vmatpush.bf16.msra.mxu0 0
      %2229 = vmatpush.bf16.msra.mxu0 0
      %2230 = vmatpush.bf16.msra.mxu0 0
      %2231 = vmatpush.bf16.msra.mxu0 0
      %2232 = vmatpush.bf16.msra.mxu0 0
      %2233 = vmatpush.bf16.msra.mxu0 %v2224
      %2234 = vmatmul.bf16.gmra.mxu0 %v1322
      %v2235 = vpop.f32.mrf.mxu0
      %v2236 = vadd.f32 0.0, %v2235
      %v2237 = vpop.f32.mrf.mxu0
      %v2238 = vadd.f32 0.0, %v2237
      %2239 = vmatmul.bf16.gmra.mxu0 %v1325
      %v2240 = vpop.f32.mrf.mxu0
      %v2241 = vadd.f32 0.0, %v2240
      %v2242 = vpop.f32.mrf.mxu0
      %v2243 = vadd.f32 0.0, %v2242
      %2244 = vmatmul.bf16.gmra.mxu0 %v1328
      %v2245 = vpop.f32.mrf.mxu0
      %v2246 = vadd.f32 0.0, %v2245
      %v2247 = vpop.f32.mrf.mxu0
      %v2248 = vadd.f32 0.0, %v2247
      %2249 = vmatmul.bf16.gmra.mxu0 %v1331
      %v2250 = vpop.f32.mrf.mxu0
      %v2251 = vadd.f32 0.0, %v2250
      %v2252 = vpop.f32.mrf.mxu0
      %v2253 = vadd.f32 0.0, %v2252
      %2254 = vmatmul.bf16.gmra.mxu0 %v1334
      %v2255 = vpop.f32.mrf.mxu0
      %v2256 = vadd.f32 0.0, %v2255
      %v2257 = vpop.f32.mrf.mxu0
      %v2258 = vadd.f32 0.0, %v2257
      %2259 = vmatmul.bf16.gmra.mxu0 %v1337
      %v2260 = vpop.f32.mrf.mxu0
      %v2261 = vadd.f32 0.0, %v2260
      %v2262 = vpop.f32.mrf.mxu0
      %v2263 = vadd.f32 0.0, %v2262
      %2264 = vmatmul.bf16.gmra.mxu0 %v1340
      %v2265 = vpop.f32.mrf.mxu0
      %v2266 = vadd.f32 0.0, %v2265
      %v2267 = vpop.f32.mrf.mxu0
      %v2268 = vadd.f32 0.0, %v2267
      %2269 = vmatmul.bf16.gmra.mxu0 %v1343
      %v2270 = vpop.f32.mrf.mxu0
      %v2271 = vadd.f32 0.0, %v2270
      %v2272 = vpop.f32.mrf.mxu0
      %v2273 = vadd.f32 0.0, %v2272
      %2274 = vmatmul.bf16.gmra.mxu0 %v1346
      %v2275 = vpop.f32.mrf.mxu0
      %v2276 = vadd.f32 0.0, %v2275
      %v2277 = vpop.f32.mrf.mxu0
      %v2278 = vadd.f32 0.0, %v2277
      %2279 = vmatmul.bf16.gmra.mxu0 %v1349
      %v2280 = vpop.f32.mrf.mxu0
      %v2281 = vadd.f32 0.0, %v2280
      %v2282 = vpop.f32.mrf.mxu0
      %v2283 = vadd.f32 0.0, %v2282
      %2284 = vmatmul.bf16.gmra.mxu0 %v1352
      %v2285 = vpop.f32.mrf.mxu0
      %v2286 = vadd.f32 0.0, %v2285
      %v2287 = vpop.f32.mrf.mxu0
      %v2288 = vadd.f32 0.0, %v2287
      %2289 = vmatmul.bf16.gmra.mxu0 %v1355
      %v2290 = vpop.f32.mrf.mxu0
      %v2291 = vadd.f32 0.0, %v2290
      %v2292 = vpop.f32.mrf.mxu0
      %v2293 = vadd.f32 0.0, %v2292
      %2294 = vmatmul.bf16.gmra.mxu0 %v1358
      %v2295 = vpop.f32.mrf.mxu0
      %v2296 = vadd.f32 0.0, %v2295
      %v2297 = vpop.f32.mrf.mxu0
      %v2298 = vadd.f32 0.0, %v2297
      %2299 = vmatmul.bf16.gmra.mxu0 %v1361
      %v2300 = vpop.f32.mrf.mxu0
      %v2301 = vadd.f32 0.0, %v2300
      %v2302 = vpop.f32.mrf.mxu0
      %v2303 = vadd.f32 0.0, %v2302
      %2304 = vmatmul.bf16.gmra.mxu0 %v1791
      %v2305 = vpop.f32.mrf.mxu0
      %v2306 = vadd.f32 0.0, %v2305
      %v2307 = vpop.f32.mrf.mxu0
      %v2308 = vadd.f32 0.0, %v2307
      %2309 = vmatmul.bf16.gmra.mxu0 %v2221
      %v2310 = vpop.f32.mrf.mxu0
      %v2311 = vadd.f32 0.0, %v2310
      %v2312 = vpop.f32.mrf.mxu0
      %v2313 = vadd.f32 0.0, %v2312
      %2314 = vdwg.mxu0
      %v2315 = vadd.f32 %v2175, %v2236
      %v2316 = vadd.f32 %v2176, %v2238
      %v2317 = vadd.f32 %v2177, %v2241
      %v2318 = vadd.f32 %v2178, %v2243
      %v2319 = vadd.f32 %v2179, %v2246
      %v2320 = vadd.f32 %v2180, %v2248
      %v2321 = vadd.f32 %v2181, %v2251
      %v2322 = vadd.f32 %v2182, %v2253
      %v2323 = vadd.f32 %v2183, %v2256
      %v2324 = vadd.f32 %v2184, %v2258
      %v2325 = vadd.f32 %v2185, %v2261
      %v2326 = vadd.f32 %v2186, %v2263
      %v2327 = vadd.f32 %v2187, %v2266
      %v2328 = vadd.f32 %v2188, %v2268
      %v2329 = vadd.f32 %v2189, %v2271
      %v2330 = vadd.f32 %v2190, %v2273
      %v2331 = vadd.f32 %v2191, %v2276
      %v2332 = vadd.f32 %v2192, %v2278
      %v2333 = vadd.f32 %v2193, %v2281
      %v2334 = vadd.f32 %v2194, %v2283
      %v2335 = vadd.f32 %v2195, %v2286
      %v2336 = vadd.f32 %v2196, %v2288
      %v2337 = vadd.f32 %v2197, %v2291
      %v2338 = vadd.f32 %v2198, %v2293
      %v2339 = vadd.f32 %v2199, %v2296
      %v2340 = vadd.f32 %v2200, %v2298
      %v2341 = vadd.f32 %v2201, %v2301
      %v2342 = vadd.f32 %v2202, %v2303
      %v2343 = vadd.f32 %v2203, %v2306
      %v2344 = vadd.f32 %v2204, %v2308
      %v2345 = vadd.f32 %v2205, %v2311
      %v2346 = vadd.f32 %v2206, %v2313
      %v2347 = vld [vmem:[%s2] sm:$0x1]
      %v2349 = vperm.slane %v2347, 0
      %v2351 = vadd.f32 %v2315, %v2349
      %v2352 = vadd.f32 %v2316, %v2349
      %v2353 = vadd.f32 %v2317, %v2349
      %v2354 = vadd.f32 %v2318, %v2349
      %v2355 = vadd.f32 %v2319, %v2349
      %v2356 = vadd.f32 %v2320, %v2349
      %v2357 = vadd.f32 %v2321, %v2349
      %v2358 = vadd.f32 %v2322, %v2349
      %v2359 = vadd.f32 %v2323, %v2349
      %v2360 = vadd.f32 %v2324, %v2349
      %v2361 = vadd.f32 %v2325, %v2349
      %v2362 = vadd.f32 %v2326, %v2349
      %v2363 = vadd.f32 %v2327, %v2349
      %v2364 = vadd.f32 %v2328, %v2349
      %v2365 = vadd.f32 %v2329, %v2349
      %v2366 = vadd.f32 %v2330, %v2349
      %v2367 = vadd.f32 %v2331, %v2349
      %v2368 = vadd.f32 %v2332, %v2349
      %v2369 = vadd.f32 %v2333, %v2349
      %v2370 = vadd.f32 %v2334, %v2349
      %v2371 = vadd.f32 %v2335, %v2349
      %v2372 = vadd.f32 %v2336, %v2349
      %v2373 = vadd.f32 %v2337, %v2349
      %v2374 = vadd.f32 %v2338, %v2349
      %v2375 = vadd.f32 %v2339, %v2349
      %v2376 = vadd.f32 %v2340, %v2349
      %v2377 = vadd.f32 %v2341, %v2349
      %v2378 = vadd.f32 %v2342, %v2349
      %v2379 = vadd.f32 %v2343, %v2349
      %v2380 = vadd.f32 %v2344, %v2349
      %v2381 = vadd.f32 %v2345, %v2349
      %v2382 = vadd.f32 %v2346, %v2349
      %vm2383 = vcmask 261120
      %v2384 = vsel %vm2383, %v2351, 0.0
      %v2385 = vsel %vm2383, %v2352, 0.0
      %v2386 = vadd.f32 %v2384, %v2385
      %v2387 = vsel %vm2383, %v2353, 0.0
      %v2388 = vadd.f32 %v2386, %v2387
      %v2389 = vsel %vm2383, %v2354, 0.0
      %v2390 = vadd.f32 %v2388, %v2389
      %v2391 = vsel %vm2383, %v2355, 0.0
      %v2392 = vadd.f32 %v2390, %v2391
      %v2393 = vsel %vm2383, %v2356, 0.0
      %v2394 = vadd.f32 %v2392, %v2393
      %v2395 = vsel %vm2383, %v2357, 0.0
      %v2396 = vadd.f32 %v2394, %v2395
      %v2397 = vsel %vm2383, %v2358, 0.0
      %v2398 = vadd.f32 %v2396, %v2397
      %v2399 = vsel %vm2383, %v2359, 0.0
      %v2400 = vadd.f32 %v2398, %v2399
      %v2401 = vsel %vm2383, %v2360, 0.0
      %v2402 = vadd.f32 %v2400, %v2401
      %v2403 = vsel %vm2383, %v2361, 0.0
      %v2404 = vadd.f32 %v2402, %v2403
      %v2405 = vsel %vm2383, %v2362, 0.0
      %v2406 = vadd.f32 %v2404, %v2405
      %v2407 = vsel %vm2383, %v2363, 0.0
      %v2408 = vadd.f32 %v2406, %v2407
      %v2409 = vsel %vm2383, %v2364, 0.0
      %v2410 = vadd.f32 %v2408, %v2409
      %v2411 = vsel %vm2383, %v2365, 0.0
      %v2412 = vadd.f32 %v2410, %v2411
      %v2413 = vsel %vm2383, %v2366, 0.0
      %v2414 = vadd.f32 %v2412, %v2413
      %v2415 = vsel %vm2383, %v2367, 0.0
      %v2416 = vadd.f32 %v2414, %v2415
      %v2417 = vsel %vm2383, %v2368, 0.0
      %v2418 = vadd.f32 %v2416, %v2417
      %v2419 = vsel %vm2383, %v2369, 0.0
      %v2420 = vadd.f32 %v2418, %v2419
      %v2421 = vsel %vm2383, %v2370, 0.0
      %v2422 = vadd.f32 %v2420, %v2421
      %v2423 = vsel %vm2383, %v2371, 0.0
      %v2424 = vadd.f32 %v2422, %v2423
      %v2425 = vsel %vm2383, %v2372, 0.0
      %v2426 = vadd.f32 %v2424, %v2425
      %v2427 = vsel %vm2383, %v2373, 0.0
      %v2428 = vadd.f32 %v2426, %v2427
      %v2429 = vsel %vm2383, %v2374, 0.0
      %v2430 = vadd.f32 %v2428, %v2429
      %v2431 = vsel %vm2383, %v2375, 0.0
      %v2432 = vadd.f32 %v2430, %v2431
      %v2433 = vsel %vm2383, %v2376, 0.0
      %v2434 = vadd.f32 %v2432, %v2433
      %v2435 = vsel %vm2383, %v2377, 0.0
      %v2436 = vadd.f32 %v2434, %v2435
      %v2437 = vsel %vm2383, %v2378, 0.0
      %v2438 = vadd.f32 %v2436, %v2437
      %v2439 = vsel %vm2383, %v2379, 0.0
      %v2440 = vadd.f32 %v2438, %v2439
      %v2441 = vsel %vm2383, %v2380, 0.0
      %v2442 = vadd.f32 %v2440, %v2441
      %v2443 = vsel %vm2383, %v2381, 0.0
      %v2444 = vadd.f32 %v2442, %v2443
      %v2445 = vsel %vm2383, %v2382, 0.0
      %v2446 = vadd.f32 %v2444, %v2445
      %v2447 = vrot.slane %v2446, 4
      %v2448 = vadd.f32 %v2446, %v2447
      %v2449 = vrot.slane %v2448, 2
      %v2450 = vadd.f32 %v2448, %v2449
      %v2451 = vrot.slane %v2450, 1
      %v2452 = vadd.f32 %v2450, %v2451
      %v2453 = vmul.f32 %v2351, %v2351
      %v2454 = vmul.f32 %v2352, %v2352
      %v2455 = vmul.f32 %v2353, %v2353
      %v2456 = vmul.f32 %v2354, %v2354
      %v2457 = vmul.f32 %v2355, %v2355
      %v2458 = vmul.f32 %v2356, %v2356
      %v2459 = vmul.f32 %v2357, %v2357
      %v2460 = vmul.f32 %v2358, %v2358
      %v2461 = vmul.f32 %v2359, %v2359
      %v2462 = vmul.f32 %v2360, %v2360
      %v2463 = vmul.f32 %v2361, %v2361
      %v2464 = vmul.f32 %v2362, %v2362
      %v2465 = vmul.f32 %v2363, %v2363
      %v2466 = vmul.f32 %v2364, %v2364
      %v2467 = vmul.f32 %v2365, %v2365
      %v2468 = vmul.f32 %v2366, %v2366
      %v2469 = vmul.f32 %v2367, %v2367
      %v2470 = vmul.f32 %v2368, %v2368
      %v2471 = vmul.f32 %v2369, %v2369
      %v2472 = vmul.f32 %v2370, %v2370
      %v2473 = vmul.f32 %v2371, %v2371
      %v2474 = vmul.f32 %v2372, %v2372
      %v2475 = vmul.f32 %v2373, %v2373
      %v2476 = vmul.f32 %v2374, %v2374
      %v2477 = vmul.f32 %v2375, %v2375
      %v2478 = vmul.f32 %v2376, %v2376
      %v2479 = vmul.f32 %v2377, %v2377
      %v2480 = vmul.f32 %v2378, %v2378
      %v2481 = vmul.f32 %v2379, %v2379
      %v2482 = vmul.f32 %v2380, %v2380
      %v2483 = vmul.f32 %v2381, %v2381
      %v2484 = vmul.f32 %v2382, %v2382
      %v2485 = vsel %vm2383, %v2453, 0.0
      %v2486 = vsel %vm2383, %v2454, 0.0
      %v2487 = vadd.f32 %v2485, %v2486
      %v2488 = vsel %vm2383, %v2455, 0.0
      %v2489 = vadd.f32 %v2487, %v2488
      %v2490 = vsel %vm2383, %v2456, 0.0
      %v2491 = vadd.f32 %v2489, %v2490
      %v2492 = vsel %vm2383, %v2457, 0.0
      %v2493 = vadd.f32 %v2491, %v2492
      %v2494 = vsel %vm2383, %v2458, 0.0
      %v2495 = vadd.f32 %v2493, %v2494
      %v2496 = vsel %vm2383, %v2459, 0.0
      %v2497 = vadd.f32 %v2495, %v2496
      %v2498 = vsel %vm2383, %v2460, 0.0
      %v2499 = vadd.f32 %v2497, %v2498
      %v2500 = vsel %vm2383, %v2461, 0.0
      %v2501 = vadd.f32 %v2499, %v2500
      %v2502 = vsel %vm2383, %v2462, 0.0
      %v2503 = vadd.f32 %v2501, %v2502
      %v2504 = vsel %vm2383, %v2463, 0.0
      %v2505 = vadd.f32 %v2503, %v2504
      %v2506 = vsel %vm2383, %v2464, 0.0
      %v2507 = vadd.f32 %v2505, %v2506
      %v2508 = vsel %vm2383, %v2465, 0.0
      %v2509 = vadd.f32 %v2507, %v2508
      %v2510 = vsel %vm2383, %v2466, 0.0
      %v2511 = vadd.f32 %v2509, %v2510
      %v2512 = vsel %vm2383, %v2467, 0.0
      %v2513 = vadd.f32 %v2511, %v2512
      %v2514 = vsel %vm2383, %v2468, 0.0
      %v2515 = vadd.f32 %v2513, %v2514
      %v2516 = vsel %vm2383, %v2469, 0.0
      %v2517 = vadd.f32 %v2515, %v2516
      %v2518 = vsel %vm2383, %v2470, 0.0
      %v2519 = vadd.f32 %v2517, %v2518
      %v2520 = vsel %vm2383, %v2471, 0.0
      %v2521 = vadd.f32 %v2519, %v2520
      %v2522 = vsel %vm2383, %v2472, 0.0
      %v2523 = vadd.f32 %v2521, %v2522
      %v2524 = vsel %vm2383, %v2473, 0.0
      %v2525 = vadd.f32 %v2523, %v2524
      %v2526 = vsel %vm2383, %v2474, 0.0
      %v2527 = vadd.f32 %v2525, %v2526
      %v2528 = vsel %vm2383, %v2475, 0.0
      %v2529 = vadd.f32 %v2527, %v2528
      %v2530 = vsel %vm2383, %v2476, 0.0
      %v2531 = vadd.f32 %v2529, %v2530
      %v2532 = vsel %vm2383, %v2477, 0.0
      %v2533 = vadd.f32 %v2531, %v2532
      %v2534 = vsel %vm2383, %v2478, 0.0
      %v2535 = vadd.f32 %v2533, %v2534
      %v2536 = vsel %vm2383, %v2479, 0.0
      %v2537 = vadd.f32 %v2535, %v2536
      %v2538 = vsel %vm2383, %v2480, 0.0
      %v2539 = vadd.f32 %v2537, %v2538
      %v2540 = vsel %vm2383, %v2481, 0.0
      %v2541 = vadd.f32 %v2539, %v2540
      %v2542 = vsel %vm2383, %v2482, 0.0
      %v2543 = vadd.f32 %v2541, %v2542
      %v2544 = vsel %vm2383, %v2483, 0.0
      %v2545 = vadd.f32 %v2543, %v2544
      %v2546 = vsel %vm2383, %v2484, 0.0
      %v2547 = vadd.f32 %v2545, %v2546
      %v2548 = vrot.slane %v2547, 4
      %v2549 = vadd.f32 %v2547, %v2548
      %v2550 = vrot.slane %v2549, 2
      %v2551 = vadd.f32 %v2549, %v2550
      %v2552 = vrot.slane %v2551, 1
      %v2553 = vadd.f32 %v2551, %v2552
      %vm2554 = vcmask 1040384
      %v2555 = vsel %vm2554, %v2452, %v2553
      %v2556 = vld [vmem:[%s5] sm:$0xff]
      %v2557 = vld [vmem:[%s5 + $0x8] sm:$0xff]
      %v2558 = vld [vmem:[%s5 + $0x10] sm:$0xff]
      %v2559 = vld [vmem:[%s5 + $0x18] sm:$0xff]
      %v2561 = vsel %vm2383, %v2555, 0
      %2563 = vmatpush.msra.mxu0 0.0
      %2564 = vmatpush.msra.mxu0 0.0
      %2565 = vmatpush.msra.mxu0 0.0
      %2566 = vmatpush.msra.mxu0 0.0
      %2567 = vmatpush.msra.mxu0 0.0
      %2568 = vmatpush.msra.mxu0 0.0
      %2569 = vmatpush.msra.mxu0 0.0
      %2570 = vmatpush.msra.mxu0 0.0
      %2571 = vmatpush.msra.mxu0 0.0
      %2572 = vmatpush.msra.mxu0 0.0
      %2573 = vmatpush.msra.mxu0 0.0
      %2574 = vmatpush.msra.mxu0 0.0
      %2575 = vmatpush.msra.mxu0 %v2559
      %2576 = vmatpush.msra.mxu0 %v2558
      %2577 = vmatpush.msra.mxu0 %v2557
      %2578 = vmatpush.msra.mxu0 %v2556
      %2579 = vmatmul.f32.gmra.mxu0 %v2561
      %v2580 = vpop.f32.mrf.mxu0
      %v2581 = vadd.f32 0.0, %v2580
      %2582 = vdwg.mxu0
      %v2583 = vmul.f32 %v2581, 0.00390625
      %v2584 = vmul.f32 %v2583, %v2583
      %v2586 = vrot.slane %v2584, 7
      %v2588 = vsub.f32 %v2583, %v2586
      %v2589 = vmax.f32 %v2588, 0.0
      %v2590 = vsel %vm2554, %v2583, %v2589
      %v2591 = vld [vmem:[%s6] sm:$0xff]
      %v2592 = vld [vmem:[%s6 + $0x8] sm:$0xff]
      %v2593 = vld [vmem:[%s6 + $0x10] sm:$0xff]
      %v2594 = vld [vmem:[%s6 + $0x18] sm:$0xff]
      %v2596 = vsel %vm2383, %v2590, 0
      %2598 = vmatpush.msra.mxu0 0.0
      %2599 = vmatpush.msra.mxu0 0.0
      %2600 = vmatpush.msra.mxu0 0.0
      %2601 = vmatpush.msra.mxu0 0.0
      %2602 = vmatpush.msra.mxu0 0.0
      %2603 = vmatpush.msra.mxu0 0.0
      %2604 = vmatpush.msra.mxu0 0.0
      %2605 = vmatpush.msra.mxu0 0.0
      %2606 = vmatpush.msra.mxu0 0.0
      %2607 = vmatpush.msra.mxu0 0.0
      %2608 = vmatpush.msra.mxu0 0.0
      %2609 = vmatpush.msra.mxu0 0.0
      %2610 = vmatpush.msra.mxu0 %v2594
      %2611 = vmatpush.msra.mxu0 %v2593
      %2612 = vmatpush.msra.mxu0 %v2592
      %2613 = vmatpush.msra.mxu0 %v2591
      %2614 = vmatmul.f32.gmra.mxu0 %v2596
      %v2615 = vpop.f32.mrf.mxu0
      %v2616 = vadd.f32 0.0, %v2615
      %2617 = vdwg.mxu0
      %v2618 = vld [vmem:[%s3] sm:$0x1]
      %v2619 = vadd.f32 %v2616, 1e-05
      %v2620 = vrsqrt.pop %v2619
      %v2621 = vmul.f32 %v2620, %v2619
      %v2622 = vmul.f32 %v2621, %v2620
      %v2623 = vmul.f32 0.5, %v2622
      %v2624 = vsub.f32 1.5, %v2623
      %v2625 = vmul.f32 %v2620, %v2624
      %vm2626 = vweird.f32 %v2619
      %vm2627 = vweird.f32 %v2620
      %vm2628 = vmor %vm2626, %vm2627
      %v2629 = vsel %vm2628, %v2620, %v2625
      %2631 = vst [vmem:[#allocation1] sm:$0xff] %v2629
      %s2632 = scalar_lea.vmem [#allocation1], 1
      %v2633 = vld [vmem:[%s2632] ss:$9 sm:$0xff]
      %v2635 = vmul.f32 %v2618, %v2633
      %v2636 = vld [vmem:[%s4] sm:$0x1]
      %v2637 = vmul.f32 %v2616, %v2635
      %v2638 = vsub.f32 %v2636, %v2637
      %v2640 = vperm.slane %v2635, 0
      %v2642 = vmul.f32 %v2351, %v2640
      %v2643 = vmul.f32 %v2352, %v2640
      %v2644 = vmul.f32 %v2353, %v2640
      %v2645 = vmul.f32 %v2354, %v2640
      %v2646 = vmul.f32 %v2355, %v2640
      %v2647 = vmul.f32 %v2356, %v2640
      %v2648 = vmul.f32 %v2357, %v2640
      %v2649 = vmul.f32 %v2358, %v2640
      %v2650 = vmul.f32 %v2359, %v2640
      %v2651 = vmul.f32 %v2360, %v2640
      %v2652 = vmul.f32 %v2361, %v2640
      %v2653 = vmul.f32 %v2362, %v2640
      %v2654 = vmul.f32 %v2363, %v2640
      %v2655 = vmul.f32 %v2364, %v2640
      %v2656 = vmul.f32 %v2365, %v2640
      %v2657 = vmul.f32 %v2366, %v2640
      %v2658 = vmul.f32 %v2367, %v2640
      %v2659 = vmul.f32 %v2368, %v2640
      %v2660 = vmul.f32 %v2369, %v2640
      %v2661 = vmul.f32 %v2370, %v2640
      %v2662 = vmul.f32 %v2371, %v2640
      %v2663 = vmul.f32 %v2372, %v2640
      %v2664 = vmul.f32 %v2373, %v2640
      %v2665 = vmul.f32 %v2374, %v2640
      %v2666 = vmul.f32 %v2375, %v2640
      %v2667 = vmul.f32 %v2376, %v2640
      %v2668 = vmul.f32 %v2377, %v2640
      %v2669 = vmul.f32 %v2378, %v2640
      %v2670 = vmul.f32 %v2379, %v2640
      %v2671 = vmul.f32 %v2380, %v2640
      %v2672 = vmul.f32 %v2381, %v2640
      %v2673 = vmul.f32 %v2382, %v2640
      %v2675 = vperm.slane %v2638, 0
      %v2677 = vadd.f32 %v2642, %v2675
      %v2678 = vadd.f32 %v2643, %v2675
      %v2679 = vadd.f32 %v2644, %v2675
      %v2680 = vadd.f32 %v2645, %v2675
      %v2681 = vadd.f32 %v2646, %v2675
      %v2682 = vadd.f32 %v2647, %v2675
      %v2683 = vadd.f32 %v2648, %v2675
      %v2684 = vadd.f32 %v2649, %v2675
      %v2685 = vadd.f32 %v2650, %v2675
      %v2686 = vadd.f32 %v2651, %v2675
      %v2687 = vadd.f32 %v2652, %v2675
      %v2688 = vadd.f32 %v2653, %v2675
      %v2689 = vadd.f32 %v2654, %v2675
      %v2690 = vadd.f32 %v2655, %v2675
      %v2691 = vadd.f32 %v2656, %v2675
      %v2692 = vadd.f32 %v2657, %v2675
      %v2693 = vadd.f32 %v2658, %v2675
      %v2694 = vadd.f32 %v2659, %v2675
      %v2695 = vadd.f32 %v2660, %v2675
      %v2696 = vadd.f32 %v2661, %v2675
      %v2697 = vadd.f32 %v2662, %v2675
      %v2698 = vadd.f32 %v2663, %v2675
      %v2699 = vadd.f32 %v2664, %v2675
      %v2700 = vadd.f32 %v2665, %v2675
      %v2701 = vadd.f32 %v2666, %v2675
      %v2702 = vadd.f32 %v2667, %v2675
      %v2703 = vadd.f32 %v2668, %v2675
      %v2704 = vadd.f32 %v2669, %v2675
      %v2705 = vadd.f32 %v2670, %v2675
      %v2706 = vadd.f32 %v2671, %v2675
      %v2707 = vadd.f32 %v2672, %v2675
      %v2708 = vadd.f32 %v2673, %v2675
      %v2709 = vmax.f32 %v2677, 0.0
      %v2710 = vmax.f32 %v2678, 0.0
      %v2711 = vmax.f32 %v2679, 0.0
      %v2712 = vmax.f32 %v2680, 0.0
      %v2713 = vmax.f32 %v2681, 0.0
      %v2714 = vmax.f32 %v2682, 0.0
      %v2715 = vmax.f32 %v2683, 0.0
      %v2716 = vmax.f32 %v2684, 0.0
      %v2717 = vmax.f32 %v2685, 0.0
      %v2718 = vmax.f32 %v2686, 0.0
      %v2719 = vmax.f32 %v2687, 0.0
      %v2720 = vmax.f32 %v2688, 0.0
      %v2721 = vmax.f32 %v2689, 0.0
      %v2722 = vmax.f32 %v2690, 0.0
      %v2723 = vmax.f32 %v2691, 0.0
      %v2724 = vmax.f32 %v2692, 0.0
      %v2725 = vmax.f32 %v2693, 0.0
      %v2726 = vmax.f32 %v2694, 0.0
      %v2727 = vmax.f32 %v2695, 0.0
      %v2728 = vmax.f32 %v2696, 0.0
      %v2729 = vmax.f32 %v2697, 0.0
      %v2730 = vmax.f32 %v2698, 0.0
      %v2731 = vmax.f32 %v2699, 0.0
      %v2732 = vmax.f32 %v2700, 0.0
      %v2733 = vmax.f32 %v2701, 0.0
      %v2734 = vmax.f32 %v2702, 0.0
      %v2735 = vmax.f32 %v2703, 0.0
      %v2736 = vmax.f32 %v2704, 0.0
      %v2737 = vmax.f32 %v2705, 0.0
      %v2738 = vmax.f32 %v2706, 0.0
      %v2739 = vmax.f32 %v2707, 0.0
      %v2740 = vmax.f32 %v2708, 0.0
      %v2741 = vpack.c.bf16 %v2709, %v2709
      %v2742 = vpack.c.bf16 %v2710, %v2710
      %v2743 = vpack.c.bf16 %v2711, %v2711
      %v2744 = vpack.c.bf16 %v2712, %v2712
      %v2745 = vpack.c.bf16 %v2713, %v2713
      %v2746 = vpack.c.bf16 %v2714, %v2714
      %v2747 = vpack.c.bf16 %v2715, %v2715
      %v2748 = vpack.c.bf16 %v2716, %v2716
      %v2749 = vpack.c.bf16 %v2717, %v2717
      %v2750 = vpack.c.bf16 %v2718, %v2718
      %v2751 = vpack.c.bf16 %v2719, %v2719
      %v2752 = vpack.c.bf16 %v2720, %v2720
      %v2753 = vpack.c.bf16 %v2721, %v2721
      %v2754 = vpack.c.bf16 %v2722, %v2722
      %v2755 = vpack.c.bf16 %v2723, %v2723
      %v2756 = vpack.c.bf16 %v2724, %v2724
      %v2757 = vpack.c.bf16 %v2725, %v2725
      %v2758 = vpack.c.bf16 %v2726, %v2726
      %v2759 = vpack.c.bf16 %v2727, %v2727
      %v2760 = vpack.c.bf16 %v2728, %v2728
      %v2761 = vpack.c.bf16 %v2729, %v2729
      %v2762 = vpack.c.bf16 %v2730, %v2730
      %v2763 = vpack.c.bf16 %v2731, %v2731
      %v2764 = vpack.c.bf16 %v2732, %v2732
      %v2765 = vpack.c.bf16 %v2733, %v2733
      %v2766 = vpack.c.bf16 %v2734, %v2734
      %v2767 = vpack.c.bf16 %v2735, %v2735
      %v2768 = vpack.c.bf16 %v2736, %v2736
      %v2769 = vpack.c.bf16 %v2737, %v2737
      %v2770 = vpack.c.bf16 %v2738, %v2738
      %v2771 = vpack.c.bf16 %v2739, %v2739
      %v2772 = vpack.c.bf16 %v2740, %v2740
      %vm2773 = vcmask 257024
      %2774 = vst.msk [vmem:[%s278] sm:$0xf] %vm2773, %v2741
      %2775 = vst.msk [vmem:[%s278 + $0x4] sm:$0xf] %vm2773, %v2742
      %2776 = vst.msk [vmem:[%s278 + $0x8] sm:$0xf] %vm2773, %v2743
      %2777 = vst.msk [vmem:[%s278 + $0xc] sm:$0xf] %vm2773, %v2744
      %2778 = vst.msk [vmem:[%s278 + $0x10] sm:$0xf] %vm2773, %v2745
      %2779 = vst.msk [vmem:[%s278 + $0x14] sm:$0xf] %vm2773, %v2746
      %2780 = vst.msk [vmem:[%s278 + $0x18] sm:$0xf] %vm2773, %v2747
      %2781 = vst.msk [vmem:[%s278 + $0x1c] sm:$0xf] %vm2773, %v2748
      %2782 = vst.msk [vmem:[%s278 + $0x20] sm:$0xf] %vm2773, %v2749
      %2783 = vst.msk [vmem:[%s278 + $0x24] sm:$0xf] %vm2773, %v2750
      %2784 = vst.msk [vmem:[%s278 + $0x28] sm:$0xf] %vm2773, %v2751
      %2785 = vst.msk [vmem:[%s278 + $0x2c] sm:$0xf] %vm2773, %v2752
      %2786 = vst.msk [vmem:[%s278 + $0x30] sm:$0xf] %vm2773, %v2753
      %2787 = vst.msk [vmem:[%s278 + $0x34] sm:$0xf] %vm2773, %v2754
      %2788 = vst.msk [vmem:[%s278 + $0x38] sm:$0xf] %vm2773, %v2755
      %2789 = vst.msk [vmem:[%s278 + $0x3c] sm:$0xf] %vm2773, %v2756
      %2790 = vst.msk [vmem:[%s278 + $0x40] sm:$0xf] %vm2773, %v2757
      %2791 = vst.msk [vmem:[%s278 + $0x44] sm:$0xf] %vm2773, %v2758
      %2792 = vst.msk [vmem:[%s278 + $0x48] sm:$0xf] %vm2773, %v2759
      %2793 = vst.msk [vmem:[%s278 + $0x4c] sm:$0xf] %vm2773, %v2760
      %2794 = vst.msk [vmem:[%s278 + $0x50] sm:$0xf] %vm2773, %v2761
      %2795 = vst.msk [vmem:[%s278 + $0x54] sm:$0xf] %vm2773, %v2762
      %2796 = vst.msk [vmem:[%s278 + $0x58] sm:$0xf] %vm2773, %v2763
      %2797 = vst.msk [vmem:[%s278 + $0x5c] sm:$0xf] %vm2773, %v2764
      %2798 = vst.msk [vmem:[%s278 + $0x60] sm:$0xf] %vm2773, %v2765
      %2799 = vst.msk [vmem:[%s278 + $0x64] sm:$0xf] %vm2773, %v2766
      %2800 = vst.msk [vmem:[%s278 + $0x68] sm:$0xf] %vm2773, %v2767
      %2801 = vst.msk [vmem:[%s278 + $0x6c] sm:$0xf] %vm2773, %v2768
      %2802 = vst.msk [vmem:[%s278 + $0x70] sm:$0xf] %vm2773, %v2769
      %2803 = vst.msk [vmem:[%s278 + $0x74] sm:$0xf] %vm2773, %v2770
      %2804 = vst.msk [vmem:[%s278 + $0x78] sm:$0xf] %vm2773, %v2771
      %2805 = vst.msk [vmem:[%s278 + $0x7c] sm:$0xf] %vm2773, %v2772
      %p2806 = scmp.lt.s32.totalorder %s18, 1
      %s2807 = scalar_select %p2806, %s18, 1
      %s2808 = smul.addr %s2807, 32
      %s2809 = smul.addr %s2808, 4
      %s2810 = scalar_lea.vmem %s7, %s2809
      // Predicated region
      $region49: #{tpu_custom_call.1} parent=47 // pred_check
        %p2811 = pneg %p188
      $region50: #{tpu_custom_call.1} parent=47 // pred_check_branch
        %2813 = sbr.rel (%p2811) target = $region52
      $region51: #{tpu_custom_call.1} parent=47 // pred_region
        _
      $region52: #{tpu_custom_call.1} parent=47 // pred_fallthru
        _
    $region48: #{tpu_custom_call.1} parent=5 // pred_fallthru
      _
    %p2814 = scmp.le.s32.totalorder 2, %s13
    // Predicated region
    $region53: #{tpu_custom_call.1} parent=5 // pred_check
      %p2815 = pneg %p2814
    $region54: #{tpu_custom_call.1} parent=5 // pred_check_branch
      %2817 = sbr.rel (%p2815) target = $region56
    $region55: #{tpu_custom_call.1} parent=5 // pred_region
      %s2818 = ssub.s32 %s13, 2
      // Predicated region
      $region57: #{tpu_custom_call.1} parent=55 // pred_check
        %p2819 = pneg %p194
      $region58: #{tpu_custom_call.1} parent=55 // pred_check_branch
        %2821 = sbr.rel (%p2819) target = $region60
      $region59: #{tpu_custom_call.1} parent=55 // pred_region
        %p2822 = scmp.lt.s32.totalorder %s19, 1
        %s2823 = scalar_select %p2822, %s19, 1
        %s2824 = smul.addr %s2823, 32
        %s2825 = smul.addr %s2824, 4
        %s2826 = scalar_lea.vmem %s7, %s2825
      $region60: #{tpu_custom_call.1} parent=55 // pred_fallthru
        _
    $region56: #{tpu_custom_call.1} parent=5 // pred_fallthru
      _
  $region6: #{tpu_custom_call.1} parent=0 // loop_footer
    %s17 = sadd.s32 1, %s13
  $region7: #{tpu_custom_call.1} parent=0 // loop_footer_branch
    %12 = sbr.rel target = $region3
  $region8: #{tpu_custom_call.1} parent=0 // loop_exit
    _

</llo_original>
